<compile_context>
chip_gen: v7x
topology: tpu7x:2x2x1
jax: 0.10.0
libtpu: 0.0.40
codegen_flags: <defaults>
</compile_context>

<pallas_src>
import numpy as np
import jax
import jax.numpy as jnp
from jax import lax
from jax.experimental import pallas as pl
from jax.experimental.pallas import tpu as pltpu


def ddim_fused_kernel(a_ref, b_ref, x_ref, w1t_ref, temb_ref, w2t_ref, bb2_ref, o_ref):
    """Runs the WHOLE DDIM time loop for one (batch, pixel-tile) block.

    a_ref, b_ref : SMEM (n_steps,) f32   per-step DDIM coefficients
    x_ref        : VMEM (1, C, TN)       x_T tile
    w1t_ref      : VMEM (HID, C)         W1^T
    temb_ref     : VMEM (n_steps, HID,1) precomputed temb @ Wt + b1, per step
    w2t_ref      : VMEM (C, HID)         W2^T
    bb2_ref      : VMEM (n_steps, C, 1)  precomputed b_t * b2^T, per step
    o_ref        : VMEM (1, C, TN)       x_0 tile (clipped)
    """
    n_steps = temb_ref.shape[0]
    w1t = w1t_ref[...]                       # loaded once, stays resident
    w2t = w2t_ref[...]

    def step_fn(step, x):
        # eps = model(x_t, t, None): per-pixel MLP, lane-dense over pixels.
        h = jnp.dot(w1t, x, preferred_element_type=jnp.float32)     # (HID, TN)
        h = jnp.tanh(h + temb_ref[step])                            # + (HID, 1)
        eps = jnp.dot(w2t, h, preferred_element_type=jnp.float32)   # (C, TN)
        # DDIM posterior mean (q_mean_variance, method='ddim'); x_t <- mean.
        # x0_pred (predict_xstart_from_eps) is dead in the ddim branch -> removed.
        # b * b2 (model output bias) folded into the precomputed bb2 table.
        return a_ref[step] * x + b_ref[step] * eps + bb2_ref[step]

    x = x_ref[0]                                                    # (C, TN) f32
    if n_steps <= 64:
        # Short static trip count: fully unrolled, all table indices static.
        for step in range(n_steps):
            x = step_fn(step, x)
    else:
        # Long schedules: rolled loop, dynamic first-axis table reads.
        x = lax.fori_loop(0, n_steps, step_fn, x)

    # Final torch.clip(x_0, -1, 1); single writeback through the output block.
    o_ref[0] = jnp.clip(x, -1.0, 1.0)


def _pick_tile_n(N, max_lanes=2048):
    """Lane-dense pixel tile: full width if small, else the largest multiple-of-128
    divisor of N that is <= max_lanes (bounds per-tile VMEM on v7x)."""
    if N % 128 != 0 or N <= max_lanes:
        return N
    for tn in range(max_lanes, 127, -128):
        if N % tn == 0:
            return tn
    return N


def build_fused_ddim_call(n_steps, B, C, N, HID, tile_n):
    num_tiles = N // tile_n
    wconst = lambda b, i: (0, 0)
    tconst = lambda b, i: (0, 0, 0)
    return pl.pallas_call(
        ddim_fused_kernel,
        out_shape=jax.ShapeDtypeStruct((B, C, N), jnp.float32),
        grid=(B, num_tiles),                                        # pixels/batch only
        in_specs=[
            pl.BlockSpec(memory_space=pltpu.MemorySpace.SMEM),      # a coefs (n_steps,)
            pl.BlockSpec(memory_space=pltpu.MemorySpace.SMEM),      # b coefs (n_steps,)
            pl.BlockSpec((1, C, tile_n), lambda b, i: (b, 0, i)),   # x_T tile
            pl.BlockSpec((HID, C), wconst),                         # W1^T
            pl.BlockSpec((n_steps, HID, 1), tconst),                # temb table (resident)
            pl.BlockSpec((C, HID), wconst),                         # W2^T
            pl.BlockSpec((n_steps, C, 1), tconst),                  # b*b2^T table
        ],
        out_specs=pl.BlockSpec((1, C, tile_n), lambda b, i: (b, 0, i)),
        compiler_params=pltpu.CompilerParams(
            dimension_semantics=("parallel", "parallel")),          # independent tiles
    )


class GaussianDiffusionSamplerDDIM:
    """JAX/Pallas port of the torch module (mean_type='epsilon', var_type='fixedlarge',
    cond=False, method='ddim')."""

    def __init__(self, model_params, beta_1, beta_T, T, img_size=16,
                 mean_type='epsilon', var_type='fixedlarge',
                 omega=2, omega_scheduler='constant', gamma=100, cond=False):
        assert mean_type == 'epsilon' and not cond
        self.T = T
        self.omega = omega
        self.omega_scheduler_method = omega_scheduler
        self.gamma = gamma
        self.params = model_params

        # Schedule buffers in float64 (torch registers them as double).
        betas = np.linspace(beta_1, beta_T, T, dtype=np.float64)
        alphas = 1.0 - betas
        self.alphas_bar = np.cumprod(alphas)
        self.sqrt_recip_alphas_bar = np.sqrt(1.0 / self.alphas_bar)
        self.sqrt_recipm1_alphas_bar = np.sqrt(1.0 / self.alphas_bar - 1.0)

    def omega_scheduler(self, t):
        if self.omega_scheduler_method == 'constant':
            self.omega_t = self.omega
        elif self.omega_scheduler_method == 'linear':
            self.omega_t = (1 - t / self.T) * (self.omega + 1) - 1
        elif self.omega_scheduler_method == 'gamma':
            if self.gamma >= 1:
                self.omega_t = np.power(self.gamma, 1 - t / self.T) / self.gamma * (self.omega + 1) - 1
            else:
                self.omega_t = (1 - np.power(self.gamma, 1 - t / self.T)) * (self.omega + 1) - 1
        else:
            raise NotImplementedError(self.omega_scheduler_method)
        return self.omega_t

    def _coef_tables(self, steps, skip):
        # torch: skip_time = clamp(t - skip, 0, T); since t <= T-1 the upper bound
        # never binds, so clipping to T-1 is behaviorally identical and avoids the
        # latent out-of-range gather.
        ts = np.asarray(steps, dtype=np.int64)
        sts = np.clip(ts - skip, 0, self.T - 1)
        c1 = np.sqrt(self.alphas_bar[ts])
        c2 = np.sqrt(1.0 - self.alphas_bar[ts])
        c3 = np.sqrt(self.alphas_bar[sts])
        c4 = np.sqrt(1.0 - self.alphas_bar[sts])
        a = c3 / c1
        b = c4 - c3 * c2 / c1
        return (jnp.asarray(a.astype(np.float32)),
                jnp.asarray(b.astype(np.float32)))

    @staticmethod
    def _temb_table(steps, Wt, b1):
        DT = Wt.shape[0]
        half = DT // 2
        freqs = np.exp(-np.log(10000.0) * np.arange(half, dtype=np.float64) / half)
        embs = np.stack([np.concatenate([np.sin(t * freqs), np.cos(t * freqs)])
                         for t in steps]).astype(np.float32)        # (n_steps, DT)
        proj = jnp.asarray(embs) @ Wt + b1                          # (n_steps, HID)
        return proj[:, :, None]                                     # (n_steps, HID, 1)

    def __call__(self, x_T, y=None, method='ddim', skip=10):
        assert method == 'ddim'
        B, C, H, W = x_T.shape
        N = H * W
        p = self.params
        HID = p['W1'].shape[1]

        steps = list(reversed(range(0, self.T, skip)))
        n_steps = len(steps)

        # Kept for parity with the torch bookkeeping; unused when cond=False.
        for t in steps:
            self.omega_t = self.omega_scheduler(t)

        a_tab, b_tab = self._coef_tables(steps, skip)
        temb_tab = self._temb_table(steps, p['Wt'], p['b1'])        # (n_steps, HID, 1)
        w1t = jnp.transpose(p['W1'])                                # (HID, C)
        w2t = jnp.transpose(p['W2'])                                # (C, HID)
        bb2_tab = b_tab[:, None, None] * jnp.transpose(p['b2'])[None]   # (n_steps, C, 1)

        tile_n = _pick_tile_n(N)
        call = build_fused_ddim_call(n_steps, B, C, N, HID, tile_n)

        # TODO(synk): torch.randn_like noise is drawn per step in the original code
        # but never used for method='ddim'; omitted here.
        # TODO(synk): return_intermediate=True path (stacking x_t per step) not ported.

        @jax.jit
        def run(x_T, a_tab, b_tab, temb_tab, w1t, w2t, bb2_tab):
            # NCHW -> (B, C, H*W): contiguous reshape only, no HBM transpose.
            x = x_T.reshape(B, C, N).astype(jnp.float32)
            x0 = call(a_tab, b_tab, x, w1t, temb_tab, w2t, bb2_tab)
            return x0.reshape(B, C, H, W)

        return run(x_T, a_tab, b_tab, temb_tab, w1t, w2t, bb2_tab)


if __name__ == "__main__":
    B, C, H, W = 2, 4, 16, 16
    HID, DT = 32, 8
    T, skip = 100, 10

    key = jax.random.PRNGKey(0)
    k1, k2, k3, kx = jax.random.split(key, 4)
    params = {
        'W1': jax.random.normal(k1, (C, HID), jnp.float32) * 0.2,
        'Wt': jax.random.normal(k2, (DT, HID), jnp.float32) * 0.2,
        'b1': jnp.zeros((1, HID), jnp.float32),
        'W2': jax.random.normal(k3, (HID, C), jnp.float32) * 0.2,
        'b2': jnp.zeros((1, C), jnp.float32),
    }

    sampler = GaussianDiffusionSamplerDDIM(params, beta_1=1e-4, beta_T=0.02, T=T,
                                           img_size=H, mean_type='epsilon',
                                           var_type='fixedlarge', omega=2,
                                           omega_scheduler='constant', cond=False)

    x_T = jax.random.normal(kx, (B, C, H, W), jnp.float32)
    x_0 = sampler(x_T, y=None, method='ddim', skip=skip)
    x_0 = jax.block_until_ready(x_0)
    assert x_0.shape == (B, C, H, W)
    assert bool(jnp.all(jnp.isfinite(x_0)))
    assert float(jnp.max(jnp.abs(x_0))) <= 1.0 + 1e-6
    print("KERNEL_OK")
</pallas_src>

<mosaic_0001>
module attributes {stable_mosaic.version = 11 : i64} {
  func.func @ddim_fused_kernel(%arg0: i32, %arg1: i32, %arg2: memref<10xf32, #tpu.memory_space<smem>>, %arg3: memref<10xf32, #tpu.memory_space<smem>>, %arg4: memref<1x4x256xf32, #tpu.memory_space<vmem>>, %arg5: memref<32x4xf32, #tpu.memory_space<vmem>>, %arg6: memref<10x32x1xf32, #tpu.memory_space<vmem>>, %arg7: memref<4x32xf32, #tpu.memory_space<vmem>>, %arg8: memref<10x4x1xf32, #tpu.memory_space<vmem>>, %arg9: memref<1x4x256xf32, #tpu.memory_space<vmem>>) attributes {dimension_semantics = [#tpu.dimension_semantics<parallel>, #tpu.dimension_semantics<parallel>], iteration_bounds = array<i64: 2, 1>, scalar_prefetch = 0 : i64, scratch_operands = 0 : i64, tpu.core_type = #tpu.core_type<tc>, window_params = [{transform_indices = @transform_0, window_bounds = array<i64: 10>}, {transform_indices = @transform_1, window_bounds = array<i64: 10>}, {transform_indices = @transform_2, window_bounds = array<i64: 1, 4, 256>}, {pipeline_mode = #tpu.pipeline_mode<synchronous>, transform_indices = @transform_3, window_bounds = array<i64: 32, 4>}, {pipeline_mode = #tpu.pipeline_mode<synchronous>, transform_indices = @transform_4, window_bounds = array<i64: 10, 32, 1>}, {pipeline_mode = #tpu.pipeline_mode<synchronous>, transform_indices = @transform_5, window_bounds = array<i64: 4, 32>}, {pipeline_mode = #tpu.pipeline_mode<synchronous>, transform_indices = @transform_6, window_bounds = array<i64: 10, 4, 1>}, {transform_indices = @transform_7, window_bounds = array<i64: 1, 4, 256>}]} {
    %c0 = arith.constant 0 : index
    %c0_0 = arith.constant 0 : index
    %0 = vector.load %arg5[%c0, %c0_0] : memref<32x4xf32, #tpu.memory_space<vmem>>, vector<32x4xf32>
    %c0_1 = arith.constant 0 : index
    %c0_2 = arith.constant 0 : index
    %1 = vector.load %arg7[%c0_1, %c0_2] : memref<4x32xf32, #tpu.memory_space<vmem>>, vector<4x32xf32>
    %c0_3 = arith.constant 0 : index
    %c0_4 = arith.constant 0 : index
    %c0_5 = arith.constant 0 : index
    %2 = vector.load %arg4[%c0_3, %c0_4, %c0_5] : memref<1x4x256xf32, #tpu.memory_space<vmem>>, vector<1x4x256xf32>
    %3 = vector.shape_cast %2 : vector<1x4x256xf32> to vector<4x256xf32>
    %cst = arith.constant dense<0.000000e+00> : vector<32x256xf32>
    %4 = tpu.matmul %0, %3, %cst {dimension_numbers = #tpu.dot_dimension_numbers<[1], [0], [0], [1], [0, 0, 1, 1], [], []>} : vector<32x4xf32>, vector<4x256xf32>, vector<32x256xf32> -> vector<32x256xf32>
    %c0_6 = arith.constant 0 : index
    %c0_7 = arith.constant 0 : index
    %c0_8 = arith.constant 0 : index
    %5 = vector.load %arg6[%c0_6, %c0_7, %c0_8] : memref<10x32x1xf32, #tpu.memory_space<vmem>>, vector<1x32x1xf32>
    %6 = vector.shape_cast %5 : vector<1x32x1xf32> to vector<32x1xf32>
    %7 = vector.broadcast %6 : vector<32x1xf32> to vector<32x256xf32>
    %8 = arith.addf %4, %7 : vector<32x256xf32>
    %9 = math.tanh %8 : vector<32x256xf32>
    %cst_9 = arith.constant dense<0.000000e+00> : vector<4x256xf32>
    %10 = tpu.matmul %1, %9, %cst_9 {dimension_numbers = #tpu.dot_dimension_numbers<[1], [0], [0], [1], [0, 0, 1, 1], [], []>} : vector<4x32xf32>, vector<32x256xf32>, vector<4x256xf32> -> vector<4x256xf32>
    %c0_10 = arith.constant 0 : index
    %11 = memref.load %arg2[%c0_10] : memref<10xf32, #tpu.memory_space<smem>>
    %12 = vector.broadcast %11 : f32 to vector<4x256xf32>
    %13 = arith.mulf %12, %3 : vector<4x256xf32>
    %c0_11 = arith.constant 0 : index
    %14 = memref.load %arg3[%c0_11] : memref<10xf32, #tpu.memory_space<smem>>
    %15 = vector.broadcast %14 : f32 to vector<4x256xf32>
    %16 = arith.mulf %15, %10 : vector<4x256xf32>
    %17 = arith.addf %13, %16 : vector<4x256xf32>
    %c0_12 = arith.constant 0 : index
    %c0_13 = arith.constant 0 : index
    %c0_14 = arith.constant 0 : index
    %18 = vector.load %arg8[%c0_12, %c0_13, %c0_14] : memref<10x4x1xf32, #tpu.memory_space<vmem>>, vector<1x4x1xf32>
    %19 = vector.shape_cast %18 : vector<1x4x1xf32> to vector<4x1xf32>
    %20 = vector.broadcast %19 : vector<4x1xf32> to vector<4x256xf32>
    %21 = arith.addf %17, %20 : vector<4x256xf32>
    %cst_15 = arith.constant dense<0.000000e+00> : vector<32x256xf32>
    %22 = tpu.matmul %0, %21, %cst_15 {dimension_numbers = #tpu.dot_dimension_numbers<[1], [0], [0], [1], [0, 0, 1, 1], [], []>} : vector<32x4xf32>, vector<4x256xf32>, vector<32x256xf32> -> vector<32x256xf32>
    %c1 = arith.constant 1 : index
    %c0_16 = arith.constant 0 : index
    %c0_17 = arith.constant 0 : index
    %23 = vector.load %arg6[%c1, %c0_16, %c0_17] : memref<10x32x1xf32, #tpu.memory_space<vmem>>, vector<1x32x1xf32>
    %24 = vector.shape_cast %23 : vector<1x32x1xf32> to vector<32x1xf32>
    %25 = vector.broadcast %24 : vector<32x1xf32> to vector<32x256xf32>
    %26 = arith.addf %22, %25 : vector<32x256xf32>
    %27 = math.tanh %26 : vector<32x256xf32>
    %cst_18 = arith.constant dense<0.000000e+00> : vector<4x256xf32>
    %28 = tpu.matmul %1, %27, %cst_18 {dimension_numbers = #tpu.dot_dimension_numbers<[1], [0], [0], [1], [0, 0, 1, 1], [], []>} : vector<4x32xf32>, vector<32x256xf32>, vector<4x256xf32> -> vector<4x256xf32>
    %c1_19 = arith.constant 1 : index
    %29 = memref.load %arg2[%c1_19] : memref<10xf32, #tpu.memory_space<smem>>
    %30 = vector.broadcast %29 : f32 to vector<4x256xf32>
    %31 = arith.mulf %30, %21 : vector<4x256xf32>
    %c1_20 = arith.constant 1 : index
    %32 = memref.load %arg3[%c1_20] : memref<10xf32, #tpu.memory_space<smem>>
    %33 = vector.broadcast %32 : f32 to vector<4x256xf32>
    %34 = arith.mulf %33, %28 : vector<4x256xf32>
    %35 = arith.addf %31, %34 : vector<4x256xf32>
    %c1_21 = arith.constant 1 : index
    %c0_22 = arith.constant 0 : index
    %c0_23 = arith.constant 0 : index
    %36 = vector.load %arg8[%c1_21, %c0_22, %c0_23] : memref<10x4x1xf32, #tpu.memory_space<vmem>>, vector<1x4x1xf32>
    %37 = vector.shape_cast %36 : vector<1x4x1xf32> to vector<4x1xf32>
    %38 = vector.broadcast %37 : vector<4x1xf32> to vector<4x256xf32>
    %39 = arith.addf %35, %38 : vector<4x256xf32>
    %cst_24 = arith.constant dense<0.000000e+00> : vector<32x256xf32>
    %40 = tpu.matmul %0, %39, %cst_24 {dimension_numbers = #tpu.dot_dimension_numbers<[1], [0], [0], [1], [0, 0, 1, 1], [], []>} : vector<32x4xf32>, vector<4x256xf32>, vector<32x256xf32> -> vector<32x256xf32>
    %c2 = arith.constant 2 : index
    %c0_25 = arith.constant 0 : index
    %c0_26 = arith.constant 0 : index
    %41 = vector.load %arg6[%c2, %c0_25, %c0_26] : memref<10x32x1xf32, #tpu.memory_space<vmem>>, vector<1x32x1xf32>
    %42 = vector.shape_cast %41 : vector<1x32x1xf32> to vector<32x1xf32>
    %43 = vector.broadcast %42 : vector<32x1xf32> to vector<32x256xf32>
    %44 = arith.addf %40, %43 : vector<32x256xf32>
    %45 = math.tanh %44 : vector<32x256xf32>
    %cst_27 = arith.constant dense<0.000000e+00> : vector<4x256xf32>
    %46 = tpu.matmul %1, %45, %cst_27 {dimension_numbers = #tpu.dot_dimension_numbers<[1], [0], [0], [1], [0, 0, 1, 1], [], []>} : vector<4x32xf32>, vector<32x256xf32>, vector<4x256xf32> -> vector<4x256xf32>
    %c2_28 = arith.constant 2 : index
    %47 = memref.load %arg2[%c2_28] : memref<10xf32, #tpu.memory_space<smem>>
    %48 = vector.broadcast %47 : f32 to vector<4x256xf32>
    %49 = arith.mulf %48, %39 : vector<4x256xf32>
    %c2_29 = arith.constant 2 : index
    %50 = memref.load %arg3[%c2_29] : memref<10xf32, #tpu.memory_space<smem>>
    %51 = vector.broadcast %50 : f32 to vector<4x256xf32>
    %52 = arith.mulf %51, %46 : vector<4x256xf32>
    %53 = arith.addf %49, %52 : vector<4x256xf32>
    %c2_30 = arith.constant 2 : index
    %c0_31 = arith.constant 0 : index
    %c0_32 = arith.constant 0 : index
    %54 = vector.load %arg8[%c2_30, %c0_31, %c0_32] : memref<10x4x1xf32, #tpu.memory_space<vmem>>, vector<1x4x1xf32>
    %55 = vector.shape_cast %54 : vector<1x4x1xf32> to vector<4x1xf32>
    %56 = vector.broadcast %55 : vector<4x1xf32> to vector<4x256xf32>
    %57 = arith.addf %53, %56 : vector<4x256xf32>
    %cst_33 = arith.constant dense<0.000000e+00> : vector<32x256xf32>
    %58 = tpu.matmul %0, %57, %cst_33 {dimension_numbers = #tpu.dot_dimension_numbers<[1], [0], [0], [1], [0, 0, 1, 1], [], []>} : vector<32x4xf32>, vector<4x256xf32>, vector<32x256xf32> -> vector<32x256xf32>
    %c3 = arith.constant 3 : index
    %c0_34 = arith.constant 0 : index
    %c0_35 = arith.constant 0 : index
    %59 = vector.load %arg6[%c3, %c0_34, %c0_35] : memref<10x32x1xf32, #tpu.memory_space<vmem>>, vector<1x32x1xf32>
    %60 = vector.shape_cast %59 : vector<1x32x1xf32> to vector<32x1xf32>
    %61 = vector.broadcast %60 : vector<32x1xf32> to vector<32x256xf32>
    %62 = arith.addf %58, %61 : vector<32x256xf32>
    %63 = math.tanh %62 : vector<32x256xf32>
    %cst_36 = arith.constant dense<0.000000e+00> : vector<4x256xf32>
    %64 = tpu.matmul %1, %63, %cst_36 {dimension_numbers = #tpu.dot_dimension_numbers<[1], [0], [0], [1], [0, 0, 1, 1], [], []>} : vector<4x32xf32>, vector<32x256xf32>, vector<4x256xf32> -> vector<4x256xf32>
    %c3_37 = arith.constant 3 : index
    %65 = memref.load %arg2[%c3_37] : memref<10xf32, #tpu.memory_space<smem>>
    %66 = vector.broadcast %65 : f32 to vector<4x256xf32>
    %67 = arith.mulf %66, %57 : vector<4x256xf32>
    %c3_38 = arith.constant 3 : index
    %68 = memref.load %arg3[%c3_38] : memref<10xf32, #tpu.memory_space<smem>>
    %69 = vector.broadcast %68 : f32 to vector<4x256xf32>
    %70 = arith.mulf %69, %64 : vector<4x256xf32>
    %71 = arith.addf %67, %70 : vector<4x256xf32>
    %c3_39 = arith.constant 3 : index
    %c0_40 = arith.constant 0 : index
    %c0_41 = arith.constant 0 : index
    %72 = vector.load %arg8[%c3_39, %c0_40, %c0_41] : memref<10x4x1xf32, #tpu.memory_space<vmem>>, vector<1x4x1xf32>
    %73 = vector.shape_cast %72 : vector<1x4x1xf32> to vector<4x1xf32>
    %74 = vector.broadcast %73 : vector<4x1xf32> to vector<4x256xf32>
    %75 = arith.addf %71, %74 : vector<4x256xf32>
    %cst_42 = arith.constant dense<0.000000e+00> : vector<32x256xf32>
    %76 = tpu.matmul %0, %75, %cst_42 {dimension_numbers = #tpu.dot_dimension_numbers<[1], [0], [0], [1], [0, 0, 1, 1], [], []>} : vector<32x4xf32>, vector<4x256xf32>, vector<32x256xf32> -> vector<32x256xf32>
    %c4 = arith.constant 4 : index
    %c0_43 = arith.constant 0 : index
    %c0_44 = arith.constant 0 : index
    %77 = vector.load %arg6[%c4, %c0_43, %c0_44] : memref<10x32x1xf32, #tpu.memory_space<vmem>>, vector<1x32x1xf32>
    %78 = vector.shape_cast %77 : vector<1x32x1xf32> to vector<32x1xf32>
    %79 = vector.broadcast %78 : vector<32x1xf32> to vector<32x256xf32>
    %80 = arith.addf %76, %79 : vector<32x256xf32>
    %81 = math.tanh %80 : vector<32x256xf32>
    %cst_45 = arith.constant dense<0.000000e+00> : vector<4x256xf32>
    %82 = tpu.matmul %1, %81, %cst_45 {dimension_numbers = #tpu.dot_dimension_numbers<[1], [0], [0], [1], [0, 0, 1, 1], [], []>} : vector<4x32xf32>, vector<32x256xf32>, vector<4x256xf32> -> vector<4x256xf32>
    %c4_46 = arith.constant 4 : index
    %83 = memref.load %arg2[%c4_46] : memref<10xf32, #tpu.memory_space<smem>>
    %84 = vector.broadcast %83 : f32 to vector<4x256xf32>
    %85 = arith.mulf %84, %75 : vector<4x256xf32>
    %c4_47 = arith.constant 4 : index
    %86 = memref.load %arg3[%c4_47] : memref<10xf32, #tpu.memory_space<smem>>
    %87 = vector.broadcast %86 : f32 to vector<4x256xf32>
    %88 = arith.mulf %87, %82 : vector<4x256xf32>
    %89 = arith.addf %85, %88 : vector<4x256xf32>
    %c4_48 = arith.constant 4 : index
    %c0_49 = arith.constant 0 : index
    %c0_50 = arith.constant 0 : index
    %90 = vector.load %arg8[%c4_48, %c0_49, %c0_50] : memref<10x4x1xf32, #tpu.memory_space<vmem>>, vector<1x4x1xf32>
    %91 = vector.shape_cast %90 : vector<1x4x1xf32> to vector<4x1xf32>
    %92 = vector.broadcast %91 : vector<4x1xf32> to vector<4x256xf32>
    %93 = arith.addf %89, %92 : vector<4x256xf32>
    %cst_51 = arith.constant dense<0.000000e+00> : vector<32x256xf32>
    %94 = tpu.matmul %0, %93, %cst_51 {dimension_numbers = #tpu.dot_dimension_numbers<[1], [0], [0], [1], [0, 0, 1, 1], [], []>} : vector<32x4xf32>, vector<4x256xf32>, vector<32x256xf32> -> vector<32x256xf32>
    %c5 = arith.constant 5 : index
    %c0_52 = arith.constant 0 : index
    %c0_53 = arith.constant 0 : index
    %95 = vector.load %arg6[%c5, %c0_52, %c0_53] : memref<10x32x1xf32, #tpu.memory_space<vmem>>, vector<1x32x1xf32>
    %96 = vector.shape_cast %95 : vector<1x32x1xf32> to vector<32x1xf32>
    %97 = vector.broadcast %96 : vector<32x1xf32> to vector<32x256xf32>
    %98 = arith.addf %94, %97 : vector<32x256xf32>
    %99 = math.tanh %98 : vector<32x256xf32>
    %cst_54 = arith.constant dense<0.000000e+00> : vector<4x256xf32>
    %100 = tpu.matmul %1, %99, %cst_54 {dimension_numbers = #tpu.dot_dimension_numbers<[1], [0], [0], [1], [0, 0, 1, 1], [], []>} : vector<4x32xf32>, vector<32x256xf32>, vector<4x256xf32> -> vector<4x256xf32>
    %c5_55 = arith.constant 5 : index
    %101 = memref.load %arg2[%c5_55] : memref<10xf32, #tpu.memory_space<smem>>
    %102 = vector.broadcast %101 : f32 to vector<4x256xf32>
    %103 = arith.mulf %102, %93 : vector<4x256xf32>
    %c5_56 = arith.constant 5 : index
    %104 = memref.load %arg3[%c5_56] : memref<10xf32, #tpu.memory_space<smem>>
    %105 = vector.broadcast %104 : f32 to vector<4x256xf32>
    %106 = arith.mulf %105, %100 : vector<4x256xf32>
    %107 = arith.addf %103, %106 : vector<4x256xf32>
    %c5_57 = arith.constant 5 : index
    %c0_58 = arith.constant 0 : index
    %c0_59 = arith.constant 0 : index
    %108 = vector.load %arg8[%c5_57, %c0_58, %c0_59] : memref<10x4x1xf32, #tpu.memory_space<vmem>>, vector<1x4x1xf32>
    %109 = vector.shape_cast %108 : vector<1x4x1xf32> to vector<4x1xf32>
    %110 = vector.broadcast %109 : vector<4x1xf32> to vector<4x256xf32>
    %111 = arith.addf %107, %110 : vector<4x256xf32>
    %cst_60 = arith.constant dense<0.000000e+00> : vector<32x256xf32>
    %112 = tpu.matmul %0, %111, %cst_60 {dimension_numbers = #tpu.dot_dimension_numbers<[1], [0], [0], [1], [0, 0, 1, 1], [], []>} : vector<32x4xf32>, vector<4x256xf32>, vector<32x256xf32> -> vector<32x256xf32>
    %c6 = arith.constant 6 : index
    %c0_61 = arith.constant 0 : index
    %c0_62 = arith.constant 0 : index
    %113 = vector.load %arg6[%c6, %c0_61, %c0_62] : memref<10x32x1xf32, #tpu.memory_space<vmem>>, vector<1x32x1xf32>
    %114 = vector.shape_cast %113 : vector<1x32x1xf32> to vector<32x1xf32>
    %115 = vector.broadcast %114 : vector<32x1xf32> to vector<32x256xf32>
    %116 = arith.addf %112, %115 : vector<32x256xf32>
    %117 = math.tanh %116 : vector<32x256xf32>
    %cst_63 = arith.constant dense<0.000000e+00> : vector<4x256xf32>
    %118 = tpu.matmul %1, %117, %cst_63 {dimension_numbers = #tpu.dot_dimension_numbers<[1], [0], [0], [1], [0, 0, 1, 1], [], []>} : vector<4x32xf32>, vector<32x256xf32>, vector<4x256xf32> -> vector<4x256xf32>
    %c6_64 = arith.constant 6 : index
    %119 = memref.load %arg2[%c6_64] : memref<10xf32, #tpu.memory_space<smem>>
    %120 = vector.broadcast %119 : f32 to vector<4x256xf32>
    %121 = arith.mulf %120, %111 : vector<4x256xf32>
    %c6_65 = arith.constant 6 : index
    %122 = memref.load %arg3[%c6_65] : memref<10xf32, #tpu.memory_space<smem>>
    %123 = vector.broadcast %122 : f32 to vector<4x256xf32>
    %124 = arith.mulf %123, %118 : vector<4x256xf32>
    %125 = arith.addf %121, %124 : vector<4x256xf32>
    %c6_66 = arith.constant 6 : index
    %c0_67 = arith.constant 0 : index
    %c0_68 = arith.constant 0 : index
    %126 = vector.load %arg8[%c6_66, %c0_67, %c0_68] : memref<10x4x1xf32, #tpu.memory_space<vmem>>, vector<1x4x1xf32>
    %127 = vector.shape_cast %126 : vector<1x4x1xf32> to vector<4x1xf32>
    %128 = vector.broadcast %127 : vector<4x1xf32> to vector<4x256xf32>
    %129 = arith.addf %125, %128 : vector<4x256xf32>
    %cst_69 = arith.constant dense<0.000000e+00> : vector<32x256xf32>
    %130 = tpu.matmul %0, %129, %cst_69 {dimension_numbers = #tpu.dot_dimension_numbers<[1], [0], [0], [1], [0, 0, 1, 1], [], []>} : vector<32x4xf32>, vector<4x256xf32>, vector<32x256xf32> -> vector<32x256xf32>
    %c7 = arith.constant 7 : index
    %c0_70 = arith.constant 0 : index
    %c0_71 = arith.constant 0 : index
    %131 = vector.load %arg6[%c7, %c0_70, %c0_71] : memref<10x32x1xf32, #tpu.memory_space<vmem>>, vector<1x32x1xf32>
    %132 = vector.shape_cast %131 : vector<1x32x1xf32> to vector<32x1xf32>
    %133 = vector.broadcast %132 : vector<32x1xf32> to vector<32x256xf32>
    %134 = arith.addf %130, %133 : vector<32x256xf32>
    %135 = math.tanh %134 : vector<32x256xf32>
    %cst_72 = arith.constant dense<0.000000e+00> : vector<4x256xf32>
    %136 = tpu.matmul %1, %135, %cst_72 {dimension_numbers = #tpu.dot_dimension_numbers<[1], [0], [0], [1], [0, 0, 1, 1], [], []>} : vector<4x32xf32>, vector<32x256xf32>, vector<4x256xf32> -> vector<4x256xf32>
    %c7_73 = arith.constant 7 : index
    %137 = memref.load %arg2[%c7_73] : memref<10xf32, #tpu.memory_space<smem>>
    %138 = vector.broadcast %137 : f32 to vector<4x256xf32>
    %139 = arith.mulf %138, %129 : vector<4x256xf32>
    %c7_74 = arith.constant 7 : index
    %140 = memref.load %arg3[%c7_74] : memref<10xf32, #tpu.memory_space<smem>>
    %141 = vector.broadcast %140 : f32 to vector<4x256xf32>
    %142 = arith.mulf %141, %136 : vector<4x256xf32>
    %143 = arith.addf %139, %142 : vector<4x256xf32>
    %c7_75 = arith.constant 7 : index
    %c0_76 = arith.constant 0 : index
    %c0_77 = arith.constant 0 : index
    %144 = vector.load %arg8[%c7_75, %c0_76, %c0_77] : memref<10x4x1xf32, #tpu.memory_space<vmem>>, vector<1x4x1xf32>
    %145 = vector.shape_cast %144 : vector<1x4x1xf32> to vector<4x1xf32>
    %146 = vector.broadcast %145 : vector<4x1xf32> to vector<4x256xf32>
    %147 = arith.addf %143, %146 : vector<4x256xf32>
    %cst_78 = arith.constant dense<0.000000e+00> : vector<32x256xf32>
    %148 = tpu.matmul %0, %147, %cst_78 {dimension_numbers = #tpu.dot_dimension_numbers<[1], [0], [0], [1], [0, 0, 1, 1], [], []>} : vector<32x4xf32>, vector<4x256xf32>, vector<32x256xf32> -> vector<32x256xf32>
    %c8 = arith.constant 8 : index
    %c0_79 = arith.constant 0 : index
    %c0_80 = arith.constant 0 : index
    %149 = vector.load %arg6[%c8, %c0_79, %c0_80] : memref<10x32x1xf32, #tpu.memory_space<vmem>>, vector<1x32x1xf32>
    %150 = vector.shape_cast %149 : vector<1x32x1xf32> to vector<32x1xf32>
    %151 = vector.broadcast %150 : vector<32x1xf32> to vector<32x256xf32>
    %152 = arith.addf %148, %151 : vector<32x256xf32>
    %153 = math.tanh %152 : vector<32x256xf32>
    %cst_81 = arith.constant dense<0.000000e+00> : vector<4x256xf32>
    %154 = tpu.matmul %1, %153, %cst_81 {dimension_numbers = #tpu.dot_dimension_numbers<[1], [0], [0], [1], [0, 0, 1, 1], [], []>} : vector<4x32xf32>, vector<32x256xf32>, vector<4x256xf32> -> vector<4x256xf32>
    %c8_82 = arith.constant 8 : index
    %155 = memref.load %arg2[%c8_82] : memref<10xf32, #tpu.memory_space<smem>>
    %156 = vector.broadcast %155 : f32 to vector<4x256xf32>
    %157 = arith.mulf %156, %147 : vector<4x256xf32>
    %c8_83 = arith.constant 8 : index
    %158 = memref.load %arg3[%c8_83] : memref<10xf32, #tpu.memory_space<smem>>
    %159 = vector.broadcast %158 : f32 to vector<4x256xf32>
    %160 = arith.mulf %159, %154 : vector<4x256xf32>
    %161 = arith.addf %157, %160 : vector<4x256xf32>
    %c8_84 = arith.constant 8 : index
    %c0_85 = arith.constant 0 : index
    %c0_86 = arith.constant 0 : index
    %162 = vector.load %arg8[%c8_84, %c0_85, %c0_86] : memref<10x4x1xf32, #tpu.memory_space<vmem>>, vector<1x4x1xf32>
    %163 = vector.shape_cast %162 : vector<1x4x1xf32> to vector<4x1xf32>
    %164 = vector.broadcast %163 : vector<4x1xf32> to vector<4x256xf32>
    %165 = arith.addf %161, %164 : vector<4x256xf32>
    %cst_87 = arith.constant dense<0.000000e+00> : vector<32x256xf32>
    %166 = tpu.matmul %0, %165, %cst_87 {dimension_numbers = #tpu.dot_dimension_numbers<[1], [0], [0], [1], [0, 0, 1, 1], [], []>} : vector<32x4xf32>, vector<4x256xf32>, vector<32x256xf32> -> vector<32x256xf32>
    %c9 = arith.constant 9 : index
    %c0_88 = arith.constant 0 : index
    %c0_89 = arith.constant 0 : index
    %167 = vector.load %arg6[%c9, %c0_88, %c0_89] : memref<10x32x1xf32, #tpu.memory_space<vmem>>, vector<1x32x1xf32>
    %168 = vector.shape_cast %167 : vector<1x32x1xf32> to vector<32x1xf32>
    %169 = vector.broadcast %168 : vector<32x1xf32> to vector<32x256xf32>
    %170 = arith.addf %166, %169 : vector<32x256xf32>
    %171 = math.tanh %170 : vector<32x256xf32>
    %cst_90 = arith.constant dense<0.000000e+00> : vector<4x256xf32>
    %172 = tpu.matmul %1, %171, %cst_90 {dimension_numbers = #tpu.dot_dimension_numbers<[1], [0], [0], [1], [0, 0, 1, 1], [], []>} : vector<4x32xf32>, vector<32x256xf32>, vector<4x256xf32> -> vector<4x256xf32>
    %c9_91 = arith.constant 9 : index
    %173 = memref.load %arg2[%c9_91] : memref<10xf32, #tpu.memory_space<smem>>
    %174 = vector.broadcast %173 : f32 to vector<4x256xf32>
    %175 = arith.mulf %174, %165 : vector<4x256xf32>
    %c9_92 = arith.constant 9 : index
    %176 = memref.load %arg3[%c9_92] : memref<10xf32, #tpu.memory_space<smem>>
    %177 = vector.broadcast %176 : f32 to vector<4x256xf32>
    %178 = arith.mulf %177, %172 : vector<4x256xf32>
    %179 = arith.addf %175, %178 : vector<4x256xf32>
    %c9_93 = arith.constant 9 : index
    %c0_94 = arith.constant 0 : index
    %c0_95 = arith.constant 0 : index
    %180 = vector.load %arg8[%c9_93, %c0_94, %c0_95] : memref<10x4x1xf32, #tpu.memory_space<vmem>>, vector<1x4x1xf32>
    %181 = vector.shape_cast %180 : vector<1x4x1xf32> to vector<4x1xf32>
    %182 = vector.broadcast %181 : vector<4x1xf32> to vector<4x256xf32>
    %183 = arith.addf %179, %182 : vector<4x256xf32>
    %cst_96 = arith.constant -1.000000e+00 : f32
    %cst_97 = arith.constant 1.000000e+00 : f32
    %184 = vector.broadcast %cst_96 : f32 to vector<4x256xf32>
    %185 = arith.maximumf %184, %183 : vector<4x256xf32>
    %186 = vector.broadcast %cst_97 : f32 to vector<4x256xf32>
    %187 = arith.minimumf %186, %185 : vector<4x256xf32>
    %c0_98 = arith.constant 0 : index
    %c0_99 = arith.constant 0 : index
    %c0_100 = arith.constant 0 : index
    %188 = vector.load %arg9[%c0_98, %c0_99, %c0_100] : memref<1x4x256xf32, #tpu.memory_space<vmem>>, vector<1x4x256xf32>
    %189 = vector.shape_cast %188 : vector<1x4x256xf32> to vector<4x256xf32>
    %190 = vector.shape_cast %187 : vector<4x256xf32> to vector<1x4x256xf32>
    tpu.vector_store %arg9[%c0_98, %c0_99, %c0_100], %190 {strides = array<i32>} : memref<1x4x256xf32, #tpu.memory_space<vmem>>, vector<1x4x256xf32>,
    return
  }
  func.func @transform_0(%arg0: i32, %arg1: i32) -> i32 {
    %c0_i32 = arith.constant 0 : i32
    %c0_i32_0 = arith.constant 0 : i32
    return %c0_i32 : i32
  }
  func.func @transform_1(%arg0: i32, %arg1: i32) -> i32 {
    %c0_i32 = arith.constant 0 : i32
    %c0_i32_0 = arith.constant 0 : i32
    return %c0_i32 : i32
  }
  func.func @transform_2(%arg0: i32, %arg1: i32) -> (i32, i32, i32) {
    %c0_i32 = arith.constant 0 : i32
    %c0_i32_0 = arith.constant 0 : i32
    return %arg0, %c0_i32, %arg1 : i32, i32, i32
  }
  func.func @transform_3(%arg0: i32, %arg1: i32) -> (i32, i32) {
    %c0_i32 = arith.constant 0 : i32
    %c0_i32_0 = arith.constant 0 : i32
    %c0_i32_1 = arith.constant 0 : i32
    return %c0_i32, %c0_i32_0 : i32, i32
  }
  func.func @transform_4(%arg0: i32, %arg1: i32) -> (i32, i32, i32) {
    %c0_i32 = arith.constant 0 : i32
    %c0_i32_0 = arith.constant 0 : i32
    %c0_i32_1 = arith.constant 0 : i32
    %c0_i32_2 = arith.constant 0 : i32
    return %c0_i32, %c0_i32_0, %c0_i32_1 : i32, i32, i32
  }
  func.func @transform_5(%arg0: i32, %arg1: i32) -> (i32, i32) {
    %c0_i32 = arith.constant 0 : i32
    %c0_i32_0 = arith.constant 0 : i32
    %c0_i32_1 = arith.constant 0 : i32
    return %c0_i32, %c0_i32_0 : i32, i32
  }
  func.func @transform_6(%arg0: i32, %arg1: i32) -> (i32, i32, i32) {
    %c0_i32 = arith.constant 0 : i32
    %c0_i32_0 = arith.constant 0 : i32
    %c0_i32_1 = arith.constant 0 : i32
    %c0_i32_2 = arith.constant 0 : i32
    return %c0_i32, %c0_i32_0, %c0_i32_1 : i32, i32, i32
  }
  func.func @transform_7(%arg0: i32, %arg1: i32) -> (i32, i32, i32) {
    %c0_i32 = arith.constant 0 : i32
    %c0_i32_0 = arith.constant 0 : i32
    return %arg0, %c0_i32, %arg1 : i32, i32, i32
  }
}

</mosaic_0001>

<llo_original>
// kernel: run.1
$region0: #{run.1}
  #allocation0 [shape = 'u32[]', space=smem, size = 0x4, offset = 0x4, fixed_abs, tag = 'smem constant byte address 0x4 - core index']
  #allocation1 [shape = 'u32[144,128]{1,0:T(1,128)}', space=vmem, size = 0x12000, scoped, tag = 'internal scratch']
  %s0 = inlined_call_operand.vmem [shape: f32[10], index: 0, kind: input, shape index: {}]
  %s1 = inlined_call_operand.vmem [shape: f32[10], index: 1, kind: input, shape index: {}]
  %s2 = inlined_call_operand.vmem [shape: f32[2,4,256], index: 2, kind: input, shape index: {}]
  %s3 = inlined_call_operand.vmem [shape: f32[32,4], index: 3, kind: input, shape index: {}]
  %s4 = inlined_call_operand.vmem [shape: f32[10,32,1], index: 4, kind: input, shape index: {}]
  %s5 = inlined_call_operand.vmem [shape: f32[4,32], index: 5, kind: input, shape index: {}]
  %s6 = inlined_call_operand.vmem [shape: f32[10,4,1], index: 6, kind: input, shape index: {}]
  %s7 = inlined_call_operand.vmem [shape: f32[2,4,256], index: 7, kind: output, shape index: {}]
  %s8 = sld [smem:[#allocation0]]
  $region69: #{run.1} parent=0
    _
  %s10 = ssub.s32 1, %s8
  %s11 = scalar_select 0, %s10, %s8
  $region1: #{run.1} parent=0
    #allocation2 [shape = 'u8[512]{0}', space=smem, size = 0x200, scoped, tag = 'input window, operand 0, single buffered']
    #allocation3 [shape = 's32[2]{0}', space=sflag, size = 0x8, scoped, tag = 'scoped memory for run.1']
    #allocation4 [shape = 'u8[512]{0}', space=smem, size = 0x200, scoped, tag = 'input window, operand 1, single buffered']
    #allocation5 [shape = 's32[1]{0}', space=sflag, size = 0x4, scoped, tag = 'scoped memory for run.1']
    %12 = vsyncpa [#allocation3], 0
    %13 = vsyncpa [#allocation5], 0
    loop: start=0, step=1, limit=4
    $region2: #{run.1} parent=1 // loop_pre_header
      _
    $region3: #{run.1} parent=1 // loop_header
      %s15 = sphi 0, %s19
      %p16 = scmp.ge.s32.totalorder %s15, 4
      %s22 = sphi 0, %s34
      %s23 = sphi 0, %s30
      %s24 = sphi 0, %s22
      %s25 = sphi 0, %s23
      %s26 = sphi 0, %s24
      %s27 = sphi 0, %s25
      %s35 = sphi 0, %s35
      %s37 = sphi 0, %s35
      %s38 = sphi 0, %s37
      %s52 = sphi 0, %s38
      %s56 = sphi 0, %s56
      %s58 = sphi 0, %s56
      %s59 = sphi 0, %s58
      %s73 = sphi 0, %s59
      %s81 = sphi 0, %s83
      %s84 = sphi 0, %s81
      %s85 = sphi 0, %s84
      %s101 = sphi 0, %s85
      %s105 = sphi 0, %s105
      %s107 = sphi 0, %s105
      %s108 = sphi 0, %s107
      %s122 = sphi 0, %s108
      %s126 = sphi 0, %s126
      %s128 = sphi 0, %s126
      %s129 = sphi 0, %s128
      %s143 = sphi 0, %s129
      %s147 = sphi 0, %s147
      %s149 = sphi 0, %s147
      %s150 = sphi 0, %s149
      %s164 = sphi 0, %s150
      %s168 = sphi 0, %s168
      %s170 = sphi 0, %s168
      %s171 = sphi 0, %s170
      %s185 = sphi 0, %s171
      %s193 = sphi 0, %s195
      %s196 = sphi 0, %s193
      %s197 = sphi 0, %s196
      %s213 = sphi 0, %s197
    $region4: #{run.1} parent=1 // loop_header_branch
      %18 = sbr.rel (%p16) target = $region8
    $region5: #{run.1} parent=1 // loop_body
      %s20 = ssub.s32 %s15, 1
      %s21 = ssub.s32 %s15, 2
      %s28 = sadd.s32 1, %s23
      %p29 = scmp.ge.s32.totalorder %s28, 1
      %s30 = scalar_select %p29, 0, %s28
      %s31 = sadd.s32 1, %s22
      %s32 = scalar_select %p29, %s31, %s22
      %p33 = scmp.ge.s32.totalorder %s32, 2
      %s34 = scalar_select %p33, 0, %s32
      %s36 = sadd.s32 %s35, 1
      %p39 = scmp.eq.s32.totalorder %s15, 1
      %p40 = scmp.ne.s32.totalorder %s35, %s37
      %p41 = scmp.eq.s32.totalorder %s15, 0
      %p42 = por %p40, %p41
      %p43 = scmp.ne.s32.totalorder %s35, %s37
      %p44 = scmp.eq.s32.totalorder %s20, 1
      %p45 = por %p43, %p44
      %p46 = scmp.ne.s32.totalorder %s37, %s38
      %p47 = scmp.eq.s32.totalorder %s20, 0
      %p48 = por %p46, %p47
      %p49 = scmp.ne.s32.totalorder %s37, %s38
      %p50 = scmp.eq.s32.totalorder %s21, 1
      %p51 = por %p49, %p50
      %p53 = scmp.ne.s32.totalorder %s38, %s52
      %p54 = scmp.eq.s32.totalorder %s21, 0
      %p55 = por %p53, %p54
      %s57 = sadd.s32 %s56, 1
      %p60 = scmp.eq.s32.totalorder %s15, 1
      %p61 = scmp.ne.s32.totalorder %s56, %s58
      %p62 = scmp.eq.s32.totalorder %s15, 0
      %p63 = por %p61, %p62
      %p64 = scmp.ne.s32.totalorder %s56, %s58
      %p65 = scmp.eq.s32.totalorder %s20, 1
      %p66 = por %p64, %p65
      %p67 = scmp.ne.s32.totalorder %s58, %s59
      %p68 = scmp.eq.s32.totalorder %s20, 0
      %p69 = por %p67, %p68
      %p70 = scmp.ne.s32.totalorder %s58, %s59
      %p71 = scmp.eq.s32.totalorder %s21, 1
      %p72 = por %p70, %p71
      %p74 = scmp.ne.s32.totalorder %s59, %s73
      %p75 = scmp.eq.s32.totalorder %s21, 0
      %p76 = por %p74, %p75
      %s77 = ssub.s32 %s22, %s34
      %s78 = ssub.s32 %s23, %s30
      %s79 = sor.u32 %s77, %s78
      %p80 = scmp.eq.s32.totalorder %s79, 0
      %s82 = sadd.s32 %s81, 1
      %s83 = scalar_select %p80, %s81, %s82
      %p86 = pneg %p80
      %p87 = scmp.eq.s32.totalorder %s15, 1
      %p88 = por %p86, %p87
      %p89 = scmp.ne.s32.totalorder %s81, %s84
      %p90 = scmp.eq.s32.totalorder %s15, 0
      %p91 = por %p89, %p90
      %p92 = scmp.ne.s32.totalorder %s81, %s84
      %p93 = scmp.eq.s32.totalorder %s20, 1
      %p94 = por %p92, %p93
      %p95 = scmp.ne.s32.totalorder %s84, %s85
      %p96 = scmp.eq.s32.totalorder %s20, 0
      %p97 = por %p95, %p96
      %p98 = scmp.ne.s32.totalorder %s84, %s85
      %p99 = scmp.eq.s32.totalorder %s21, 1
      %p100 = por %p98, %p99
      %p102 = scmp.ne.s32.totalorder %s85, %s101
      %p103 = scmp.eq.s32.totalorder %s21, 0
      %p104 = por %p102, %p103
      %s106 = sadd.s32 %s105, 1
      %p109 = scmp.eq.s32.totalorder %s15, 1
      %p110 = scmp.ne.s32.totalorder %s105, %s107
      %p111 = scmp.eq.s32.totalorder %s15, 0
      %p112 = por %p110, %p111
      %p113 = scmp.ne.s32.totalorder %s105, %s107
      %p114 = scmp.eq.s32.totalorder %s20, 1
      %p115 = por %p113, %p114
      %p116 = scmp.ne.s32.totalorder %s107, %s108
      %p117 = scmp.eq.s32.totalorder %s20, 0
      %p118 = por %p116, %p117
      %p119 = scmp.ne.s32.totalorder %s107, %s108
      %p120 = scmp.eq.s32.totalorder %s21, 1
      %p121 = por %p119, %p120
      %p123 = scmp.ne.s32.totalorder %s108, %s122
      %p124 = scmp.eq.s32.totalorder %s21, 0
      %p125 = por %p123, %p124
      %s127 = sadd.s32 %s126, 1
      %p130 = scmp.eq.s32.totalorder %s15, 1
      %p131 = scmp.ne.s32.totalorder %s126, %s128
      %p132 = scmp.eq.s32.totalorder %s15, 0
      %p133 = por %p131, %p132
      %p134 = scmp.ne.s32.totalorder %s126, %s128
      %p135 = scmp.eq.s32.totalorder %s20, 1
      %p136 = por %p134, %p135
      %p137 = scmp.ne.s32.totalorder %s128, %s129
      %p138 = scmp.eq.s32.totalorder %s20, 0
      %p139 = por %p137, %p138
      %p140 = scmp.ne.s32.totalorder %s128, %s129
      %p141 = scmp.eq.s32.totalorder %s21, 1
      %p142 = por %p140, %p141
      %p144 = scmp.ne.s32.totalorder %s129, %s143
      %p145 = scmp.eq.s32.totalorder %s21, 0
      %p146 = por %p144, %p145
      %s148 = sadd.s32 %s147, 1
      %p151 = scmp.eq.s32.totalorder %s15, 1
      %p152 = scmp.ne.s32.totalorder %s147, %s149
      %p153 = scmp.eq.s32.totalorder %s15, 0
      %p154 = por %p152, %p153
      %p155 = scmp.ne.s32.totalorder %s147, %s149
      %p156 = scmp.eq.s32.totalorder %s20, 1
      %p157 = por %p155, %p156
      %p158 = scmp.ne.s32.totalorder %s149, %s150
      %p159 = scmp.eq.s32.totalorder %s20, 0
      %p160 = por %p158, %p159
      %p161 = scmp.ne.s32.totalorder %s149, %s150
      %p162 = scmp.eq.s32.totalorder %s21, 1
      %p163 = por %p161, %p162
      %p165 = scmp.ne.s32.totalorder %s150, %s164
      %p166 = scmp.eq.s32.totalorder %s21, 0
      %p167 = por %p165, %p166
      %s169 = sadd.s32 %s168, 1
      %p172 = scmp.eq.s32.totalorder %s15, 1
      %p173 = scmp.ne.s32.totalorder %s168, %s170
      %p174 = scmp.eq.s32.totalorder %s15, 0
      %p175 = por %p173, %p174
      %p176 = scmp.ne.s32.totalorder %s168, %s170
      %p177 = scmp.eq.s32.totalorder %s20, 1
      %p178 = por %p176, %p177
      %p179 = scmp.ne.s32.totalorder %s170, %s171
      %p180 = scmp.eq.s32.totalorder %s20, 0
      %p181 = por %p179, %p180
      %p182 = scmp.ne.s32.totalorder %s170, %s171
      %p183 = scmp.eq.s32.totalorder %s21, 1
      %p184 = por %p182, %p183
      %p186 = scmp.ne.s32.totalorder %s171, %s185
      %p187 = scmp.eq.s32.totalorder %s21, 0
      %p188 = por %p186, %p187
      %s189 = ssub.s32 %s22, %s34
      %s190 = ssub.s32 %s23, %s30
      %s191 = sor.u32 %s189, %s190
      %p192 = scmp.eq.s32.totalorder %s191, 0
      %s194 = sadd.s32 %s193, 1
      %s195 = scalar_select %p192, %s193, %s194
      %p198 = pneg %p192
      %p199 = scmp.eq.s32.totalorder %s15, 1
      %p200 = por %p198, %p199
      %p201 = scmp.ne.s32.totalorder %s193, %s196
      %p202 = scmp.eq.s32.totalorder %s15, 0
      %p203 = por %p201, %p202
      %p204 = scmp.ne.s32.totalorder %s193, %s196
      %p205 = scmp.eq.s32.totalorder %s20, 1
      %p206 = por %p204, %p205
      %p207 = scmp.ne.s32.totalorder %s196, %s197
      %p208 = scmp.eq.s32.totalorder %s20, 0
      %p209 = por %p207, %p208
      %p210 = scmp.ne.s32.totalorder %s196, %s197
      %p211 = scmp.eq.s32.totalorder %s21, 1
      %p212 = por %p210, %p211
      %p214 = scmp.ne.s32.totalorder %s197, %s213
      %p215 = scmp.eq.s32.totalorder %s21, 0
      %p216 = por %p214, %p215
      %p217 = scmp.le.s32.totalorder 1, %s15
      %p218 = scmp.lt.s32.totalorder %s15, 3
      %p219 = pnand %p217, %p218
      %p220 = pneg %p219
      // Predicated region
      $region9: #{run.1} parent=5 // pred_check
        _
      $region10: #{run.1} parent=5 // pred_check_branch
        %222 = sbr.rel (%p219) target = $region12
      $region11: #{run.1} parent=5 // pred_region
        %s223 = ssub.s32 %s15, 1
        // Predicated region
        $region13: #{run.1} parent=11 // pred_check
          %p224 = pneg %p48
        $region14: #{run.1} parent=11 // pred_check_branch
          %226 = sbr.rel (%p224) target = $region16
        $region15: #{run.1} parent=11 // pred_region
          %s228 = ssub.s32 16, 16
          %229 = vsyncadd [#allocation3], %s228
          %s231 = sshll.u32 %s0, 4
          %s232 = int_to_ptr.vmem [resolvable:$true] %s231
          %234 = dma.vmem_to_smem %s232, 16, [#allocation2], [#allocation3]
        $region16: #{run.1} parent=11 // pred_fallthru
          _
        // Predicated region
        $region17: #{run.1} parent=11 // pred_check
          %p235 = pneg %p69
        $region18: #{run.1} parent=11 // pred_check_branch
          %237 = sbr.rel (%p235) target = $region20
        $region19: #{run.1} parent=11 // pred_region
          %s239 = ssub.s32 16, 16
          %240 = vsyncadd [#allocation5], %s239
          %s242 = sshll.u32 %s1, 4
          %s243 = int_to_ptr.vmem [resolvable:$true] %s242
          %245 = dma.vmem_to_smem %s243, 16, [#allocation4], [#allocation5]
        $region20: #{run.1} parent=11 // pred_fallthru
          _
        // Predicated region
        $region21: #{run.1} parent=11 // pred_check
          %p246 = pneg %p118
        $region22: #{run.1} parent=11 // pred_check_branch
          %248 = sbr.rel (%p246) target = $region24
        $region23: #{run.1} parent=11 // pred_region
          _
        $region24: #{run.1} parent=11 // pred_fallthru
          _
        // Predicated region
        $region25: #{run.1} parent=11 // pred_check
          %p249 = pneg %p139
        $region26: #{run.1} parent=11 // pred_check_branch
          %251 = sbr.rel (%p249) target = $region28
        $region27: #{run.1} parent=11 // pred_region
          _
        $region28: #{run.1} parent=11 // pred_fallthru
          _
        // Predicated region
        $region29: #{run.1} parent=11 // pred_check
          %p252 = pneg %p160
        $region30: #{run.1} parent=11 // pred_check_branch
          %254 = sbr.rel (%p252) target = $region32
        $region31: #{run.1} parent=11 // pred_region
          _
        $region32: #{run.1} parent=11 // pred_fallthru
          _
        // Predicated region
        $region33: #{run.1} parent=11 // pred_check
          %p255 = pneg %p181
        $region34: #{run.1} parent=11 // pred_check_branch
          %257 = sbr.rel (%p255) target = $region36
        $region35: #{run.1} parent=11 // pred_region
          _
        $region36: #{run.1} parent=11 // pred_fallthru
          _
      $region12: #{run.1} parent=5 // pred_fallthru
        _
      %p258 = scmp.lt.s32.totalorder %s15, 2
      // Predicated region
      $region37: #{run.1} parent=5 // pred_check
        %p259 = pneg %p258
      $region38: #{run.1} parent=5 // pred_check_branch
        %261 = sbr.rel (%p259) target = $region40
      $region39: #{run.1} parent=5 // pred_region
        // Predicated region
        $region41: #{run.1} parent=39 // pred_check
          %p262 = pneg %p91
        $region42: #{run.1} parent=39 // pred_check_branch
          %264 = sbr.rel (%p262) target = $region44
        $region43: #{run.1} parent=39 // pred_region
          %s265 = smul.u32 2, %s23
          %p266 = scmp.lt.s32.totalorder %s22, 1
          %s267 = scalar_select %p266, %s22, 1
          %p268 = scmp.lt.s32.totalorder %s265, 1
          %s269 = scalar_select %p268, %s265, 1
          %s270 = smul.addr %s267, 2
          %s271 = sadd.s32 %s269, %s270
          %s272 = smul.addr %s271, 4
          %s273 = scalar_lea.vmem %s2, %s272
          %s274 = smul.u32 2, %s23
        $region44: #{run.1} parent=39 // pred_fallthru
          _
      $region40: #{run.1} parent=5 // pred_fallthru
        _
      %p275 = scmp.le.s32.totalorder 1, %s15
      %p276 = scmp.lt.s32.totalorder %s15, 3
      %p277 = pnand %p275, %p276
      %p278 = pneg %p277
      // Predicated region
      $region45: #{run.1} parent=5 // pred_check
        _
      $region46: #{run.1} parent=5 // pred_check_branch
        %280 = sbr.rel (%p277) target = $region48
      $region47: #{run.1} parent=5 // pred_region
        %s281 = ssub.s32 %s15, 1
        // Predicated region
        $region49: #{run.1} parent=47 // pred_check
          %p282 = pneg %p48
        $region50: #{run.1} parent=47 // pred_check_branch
          %284 = sbr.rel (%p282) target = $region52
        $region51: #{run.1} parent=47 // pred_region
          %285 = dma.done [#allocation3], 16
        $region52: #{run.1} parent=47 // pred_fallthru
          _
        // Predicated region
        $region53: #{run.1} parent=47 // pred_check
          %p286 = pneg %p69
        $region54: #{run.1} parent=47 // pred_check_branch
          %288 = sbr.rel (%p286) target = $region56
        $region55: #{run.1} parent=47 // pred_region
          %289 = dma.done [#allocation5], 16
        $region56: #{run.1} parent=47 // pred_fallthru
          _
        %290 = sfence
        %p291 = pneg %p48
        %p292 = pneg %p45
        %p293 = pneg %p69
        %p294 = pneg %p66
        %s295 = smul.u32 2, %s25
        %p296 = scmp.lt.s32.totalorder %s24, 1
        %s297 = scalar_select %p296, %s24, 1
        %p298 = scmp.lt.s32.totalorder %s295, 1
        %s299 = scalar_select %p298, %s295, 1
        %s300 = smul.addr %s297, 2
        %s301 = sadd.s32 %s299, %s300
        %s302 = smul.addr %s301, 4
        %s303 = scalar_lea.vmem %s2, %s302
        %p304 = pneg %p97
        %p305 = pneg %p94
        %p306 = pneg %p118
        %p307 = pneg %p115
        %p308 = pneg %p139
        %p309 = pneg %p136
        %p310 = pneg %p160
        %p311 = pneg %p157
        %p312 = pneg %p181
        %p313 = pneg %p178
        %p314 = pneg %p209
        %p315 = pneg %p206
        %s316 = smul.u32 2, %s25
        %p317 = scmp.lt.s32.totalorder %s24, 1
        %s318 = scalar_select %p317, %s24, 1
        %p319 = scmp.lt.s32.totalorder %s316, 1
        %s320 = scalar_select %p319, %s316, 1
        %s321 = smul.addr %s318, 2
        %s322 = sadd.s32 %s320, %s321
        %s323 = smul.addr %s322, 4
        %s324 = scalar_lea.vmem %s7, %s323
        %s325 = smul.u32 2, %s25
        %p326 = scmp.lt.s32.totalorder %s24, 1
        %s327 = scalar_select %p326, %s24, 1
        %p328 = scmp.lt.s32.totalorder %s325, 1
        %s329 = scalar_select %p328, %s325, 1
        %s330 = smul.addr %s327, 2
        %s331 = sadd.s32 %s329, %s330
        %s332 = smul.addr %s331, 4
        %s333 = scalar_lea.vmem %s2, %s332
        %s334 = smul.u32 2, %s25
        %s335 = smul.u32 2, %s25
        %p336 = scmp.lt.s32.totalorder %s24, 1
        %s337 = scalar_select %p336, %s24, 1
        %p338 = scmp.lt.s32.totalorder %s335, 1
        %s339 = scalar_select %p338, %s335, 1
        %s340 = smul.addr %s337, 2
        %s341 = sadd.s32 %s339, %s340
        %s342 = smul.addr %s341, 4
        %s343 = scalar_lea.vmem %s7, %s342
        %s344 = smul.u32 2, %s25
        %v345 = vld [vmem:[%s3] sm:$0xff]
        %v346 = vld [vmem:[%s3 + $0x8] sm:$0xff]
        %v347 = vld [vmem:[%s3 + $0x10] sm:$0xff]
        %v348 = vld [vmem:[%s3 + $0x18] sm:$0xff]
        %v349 = vld [vmem:[%s5] sm:$0xf]
        %v350 = vld [vmem:[%s333] sm:$0xff]
        %v351 = vld [vmem:[%s4] sm:$0xff]
        %v352 = vld [vmem:[%s4 + $0x8] sm:$0xff]
        %v353 = vld [vmem:[%s4 + $0x10] sm:$0xff]
        %v354 = vld [vmem:[%s4 + $0x18] sm:$0xff]
        %356 = vset.pattern.permute.xlu0 0
        %357 = vperm.xlu0 %356, %v351
        %v358 = vpop.permute.xlu0 %357
        %361 = vset.pattern.permute.xlu0 0
        %362 = vperm.xlu0 %361, %v352
        %v363 = vpop.permute.xlu0 %362
        %366 = vset.pattern.permute.xlu0 0
        %367 = vperm.xlu0 %366, %v353
        %v368 = vpop.permute.xlu0 %367
        %371 = vset.pattern.permute.xlu0 0
        %372 = vperm.xlu0 %371, %v354
        %v373 = vpop.permute.xlu0 %372
        %v376 = vcombine.high %v350, %v350
        %vm377 = vcmask 31744
        %v379 = vsel %vm377, %v345, 0
        %v382 = vsel %vm377, %v346, 0
        %v385 = vsel %vm377, %v347, 0
        %v388 = vsel %vm377, %v348, 0
        %vm390 = vcmask 1043456
        %v391 = vsel %vm390, %v350, 0
        %v393 = vsel %vm390, %v376, 0
        %395 = vmatprep.subr.mxu0 %v393
        %396 = vmatpush1.msra.mxu0 %v391
        %397 = vmatprep.subr.mxu0 0.0
        %398 = vmatpush1.msra.mxu0 0.0
        %399 = vmatprep.subr.mxu0 0.0
        %400 = vmatpush1.msra.mxu0 0.0
        %401 = vmatprep.subr.mxu0 0.0
        %402 = vmatpush1.msra.mxu0 0.0
        %403 = vmatprep.subr.mxu0 0.0
        %404 = vmatpush1.msra.mxu0 0.0
        %405 = vmatprep.subr.mxu0 0.0
        %406 = vmatpush1.msra.mxu0 0.0
        %407 = vmatprep.subr.mxu0 0.0
        %408 = vmatpush1.msra.mxu0 0.0
        %409 = vmatprep.subr.mxu0 0.0
        %410 = vmatpush1.msra.mxu0 0.0
        %411 = vmatprep.subr.mxu0 0.0
        %412 = vmatpush1.msra.mxu0 0.0
        %413 = vmatprep.subr.mxu0 0.0
        %414 = vmatpush1.msra.mxu0 0.0
        %415 = vmatprep.subr.mxu0 0.0
        %416 = vmatpush1.msra.mxu0 0.0
        %417 = vmatprep.subr.mxu0 0.0
        %418 = vmatpush1.msra.mxu0 0.0
        %419 = vmatprep.subr.mxu0 0.0
        %420 = vmatpush1.msra.mxu0 0.0
        %421 = vmatprep.subr.mxu0 0.0
        %422 = vmatpush1.msra.mxu0 0.0
        %423 = vmatprep.subr.mxu0 0.0
        %424 = vmatpush1.msra.mxu0 0.0
        %425 = vmatprep.subr.mxu0 0.0
        %426 = vmatpush1.msra.mxu0 0.0
        %427 = vmatprep.subr.mxu0 0.0
        %428 = vmatpush1.msra.mxu0 0.0
        %429 = vmatprep.subr.mxu0 0.0
        %430 = vmatpush1.msra.mxu0 0.0
        %431 = vmatprep.subr.mxu0 0.0
        %432 = vmatpush1.msra.mxu0 0.0
        %433 = vmatprep.subr.mxu0 0.0
        %434 = vmatpush1.msra.mxu0 0.0
        %435 = vmatprep.subr.mxu0 0.0
        %436 = vmatpush1.msra.mxu0 0.0
        %437 = vmatprep.subr.mxu0 0.0
        %438 = vmatpush1.msra.mxu0 0.0
        %439 = vmatprep.subr.mxu0 0.0
        %440 = vmatpush1.msra.mxu0 0.0
        %441 = vmatprep.subr.mxu0 0.0
        %442 = vmatpush1.msra.mxu0 0.0
        %443 = vmatprep.subr.mxu0 0.0
        %444 = vmatpush1.msra.mxu0 0.0
        %445 = vmatprep.subr.mxu0 0.0
        %446 = vmatpush1.msra.mxu0 0.0
        %447 = vmatprep.subr.mxu0 0.0
        %448 = vmatpush1.msra.mxu0 0.0
        %449 = vmatprep.subr.mxu0 0.0
        %450 = vmatpush1.msra.mxu0 0.0
        %451 = vmatprep.subr.mxu0 0.0
        %452 = vmatpush1.msra.mxu0 0.0
        %453 = vmatprep.subr.mxu0 0.0
        %454 = vmatpush1.msra.mxu0 0.0
        %455 = vmatprep.subr.mxu0 0.0
        %456 = vmatpush1.msra.mxu0 0.0
        %457 = vmatprep.subr.mxu0 0.0
        %458 = vmatpush1.msra.mxu0 0.0
        %459 = vmatprep.mubr.f32.mxu0 0.0
        %460 = vmatmul.mubr.f32.gmra.mrb[0].mxu0 %v379
        %v461 = vpop.f32.mrb[0].mxu0
        %v462 = vadd.f32 %v358, %v461
        %v463 = vpop.f32.mrb[0].mxu0
        %v464 = vadd.f32 %v358, %v463
        %465 = vmatprep.mubr.f32.mxu0 0.0
        %466 = vmatmul.mubr.f32.gmra.mrb[0].mxu0 %v382
        %v467 = vpop.f32.mrb[0].mxu0
        %v468 = vadd.f32 %v363, %v467
        %v469 = vpop.f32.mrb[0].mxu0
        %v470 = vadd.f32 %v363, %v469
        %471 = vmatprep.mubr.f32.mxu0 0.0
        %472 = vmatmul.mubr.f32.gmra.mrb[0].mxu0 %v385
        %v473 = vpop.f32.mrb[0].mxu0
        %v474 = vadd.f32 %v368, %v473
        %v475 = vpop.f32.mrb[0].mxu0
        %v476 = vadd.f32 %v368, %v475
        %477 = vmatprep.mubr.f32.mxu0 0.0
        %478 = vmatmul.mubr.f32.gmra.mrb[0].mxu0 %v388
        %v479 = vpop.f32.mrb[0].mxu0
        %v480 = vadd.f32 %v373, %v479
        %v481 = vpop.f32.mrb[0].mxu0
        %v482 = vadd.f32 %v373, %v481
        %483 = vdwg.mxu0
        %v484 = vtanh.pop %v462
        %v485 = vtanh.pop %v464
        %v486 = vtanh.pop %v468
        %v487 = vtanh.pop %v470
        %v488 = vtanh.pop %v474
        %v489 = vtanh.pop %v476
        %v490 = vtanh.pop %v480
        %v491 = vtanh.pop %v482
        %vm492 = vcmask 261120
        %v494 = vsel %vm492, %v349, 0
        %496 = vmatprep.subr.mxu0 %v485
        %497 = vmatpush1.msra.mxu0 %v484
        %498 = vmatprep.subr.mxu0 %v487
        %499 = vmatpush1.msra.mxu0 %v486
        %500 = vmatprep.subr.mxu0 %v489
        %501 = vmatpush1.msra.mxu0 %v488
        %502 = vmatprep.subr.mxu0 %v491
        %503 = vmatpush1.msra.mxu0 %v490
        %504 = vmatprep.subr.mxu0 0.0
        %505 = vmatpush1.msra.mxu0 0.0
        %506 = vmatprep.subr.mxu0 0.0
        %507 = vmatpush1.msra.mxu0 0.0
        %508 = vmatprep.subr.mxu0 0.0
        %509 = vmatpush1.msra.mxu0 0.0
        %510 = vmatprep.subr.mxu0 0.0
        %511 = vmatpush1.msra.mxu0 0.0
        %512 = vmatprep.subr.mxu0 0.0
        %513 = vmatpush1.msra.mxu0 0.0
        %514 = vmatprep.subr.mxu0 0.0
        %515 = vmatpush1.msra.mxu0 0.0
        %516 = vmatprep.subr.mxu0 0.0
        %517 = vmatpush1.msra.mxu0 0.0
        %518 = vmatprep.subr.mxu0 0.0
        %519 = vmatpush1.msra.mxu0 0.0
        %520 = vmatprep.subr.mxu0 0.0
        %521 = vmatpush1.msra.mxu0 0.0
        %522 = vmatprep.subr.mxu0 0.0
        %523 = vmatpush1.msra.mxu0 0.0
        %524 = vmatprep.subr.mxu0 0.0
        %525 = vmatpush1.msra.mxu0 0.0
        %526 = vmatprep.subr.mxu0 0.0
        %527 = vmatpush1.msra.mxu0 0.0
        %528 = vmatprep.subr.mxu0 0.0
        %529 = vmatpush1.msra.mxu0 0.0
        %530 = vmatprep.subr.mxu0 0.0
        %531 = vmatpush1.msra.mxu0 0.0
        %532 = vmatprep.subr.mxu0 0.0
        %533 = vmatpush1.msra.mxu0 0.0
        %534 = vmatprep.subr.mxu0 0.0
        %535 = vmatpush1.msra.mxu0 0.0
        %536 = vmatprep.subr.mxu0 0.0
        %537 = vmatpush1.msra.mxu0 0.0
        %538 = vmatprep.subr.mxu0 0.0
        %539 = vmatpush1.msra.mxu0 0.0
        %540 = vmatprep.subr.mxu0 0.0
        %541 = vmatpush1.msra.mxu0 0.0
        %542 = vmatprep.subr.mxu0 0.0
        %543 = vmatpush1.msra.mxu0 0.0
        %544 = vmatprep.subr.mxu0 0.0
        %545 = vmatpush1.msra.mxu0 0.0
        %546 = vmatprep.subr.mxu0 0.0
        %547 = vmatpush1.msra.mxu0 0.0
        %548 = vmatprep.subr.mxu0 0.0
        %549 = vmatpush1.msra.mxu0 0.0
        %550 = vmatprep.subr.mxu0 0.0
        %551 = vmatpush1.msra.mxu0 0.0
        %552 = vmatprep.subr.mxu0 0.0
        %553 = vmatpush1.msra.mxu0 0.0
        %554 = vmatprep.subr.mxu0 0.0
        %555 = vmatpush1.msra.mxu0 0.0
        %556 = vmatprep.subr.mxu0 0.0
        %557 = vmatpush1.msra.mxu0 0.0
        %558 = vmatprep.subr.mxu0 0.0
        %559 = vmatpush1.msra.mxu0 0.0
        %560 = vmatprep.mubr.f32.mxu0 0.0
        %561 = vmatmul.mubr.f32.gmra.mrb[0].mxu0 %v494
        %v562 = vpop.f32.mrb[0].mxu0
        %v563 = vadd.f32 0.0, %v562
        %v564 = vpop.f32.mrb[0].mxu0
        %v565 = vadd.f32 0.0, %v564
        %566 = vdwg.mxu0
        %s567 = sld [smem:[#allocation2]]
        %v568 = vstv %s567
        %v569 = vmul.f32 %v568, %v350
        %s570 = sld [smem:[#allocation4]]
        %v571 = vstv %s570
        %v572 = vmul.f32 %v571, %v563
        %v573 = vmul.f32 %v571, %v565
        %v576 = vcombine.low %v572, %v573
        %v578 = vadd.f32 %v569, %v576
        %v579 = vld [vmem:[%s6] sm:$0xf]
        %581 = vset.pattern.permute.xlu0 0
        %582 = vperm.xlu0 %581, %v579
        %v583 = vpop.permute.xlu0 %582
        %v585 = vunpack.c.l.s4 839922192
        %v586 = vunpack.c.0.s8 %v585
        %v587 = vlaneseq
        %v588 = vshrl.u32 %v587, 7
        %v589 = vsub.s32 %v586, %v588
        %v590 = vrot.slane %v583, %v589
        %v592 = vadd.f32 %v578, %v590
        %s593 = scalar_lea.vmem %s4, 32
        %v594 = vld [vmem:[%s593] sm:$0xff]
        %v595 = vld [vmem:[%s593 + $0x8] sm:$0xff]
        %v596 = vld [vmem:[%s593 + $0x10] sm:$0xff]
        %v597 = vld [vmem:[%s593 + $0x18] sm:$0xff]
        %599 = vset.pattern.permute.xlu0 0
        %600 = vperm.xlu0 %599, %v594
        %v601 = vpop.permute.xlu0 %600
        %604 = vset.pattern.permute.xlu0 0
        %605 = vperm.xlu0 %604, %v595
        %v606 = vpop.permute.xlu0 %605
        %609 = vset.pattern.permute.xlu0 0
        %610 = vperm.xlu0 %609, %v596
        %v611 = vpop.permute.xlu0 %610
        %614 = vset.pattern.permute.xlu0 0
        %615 = vperm.xlu0 %614, %v597
        %v616 = vpop.permute.xlu0 %615
        %v619 = vcombine.high %v592, %v592
        %v620 = vsel %vm390, %v592, 0
        %v622 = vsel %vm390, %v619, 0
        %624 = vmatprep.subr.mxu0 %v622
        %625 = vmatpush1.msra.mxu0 %v620
        %626 = vmatprep.subr.mxu0 0.0
        %627 = vmatpush1.msra.mxu0 0.0
        %628 = vmatprep.subr.mxu0 0.0
        %629 = vmatpush1.msra.mxu0 0.0
        %630 = vmatprep.subr.mxu0 0.0
        %631 = vmatpush1.msra.mxu0 0.0
        %632 = vmatprep.subr.mxu0 0.0
        %633 = vmatpush1.msra.mxu0 0.0
        %634 = vmatprep.subr.mxu0 0.0
        %635 = vmatpush1.msra.mxu0 0.0
        %636 = vmatprep.subr.mxu0 0.0
        %637 = vmatpush1.msra.mxu0 0.0
        %638 = vmatprep.subr.mxu0 0.0
        %639 = vmatpush1.msra.mxu0 0.0
        %640 = vmatprep.subr.mxu0 0.0
        %641 = vmatpush1.msra.mxu0 0.0
        %642 = vmatprep.subr.mxu0 0.0
        %643 = vmatpush1.msra.mxu0 0.0
        %644 = vmatprep.subr.mxu0 0.0
        %645 = vmatpush1.msra.mxu0 0.0
        %646 = vmatprep.subr.mxu0 0.0
        %647 = vmatpush1.msra.mxu0 0.0
        %648 = vmatprep.subr.mxu0 0.0
        %649 = vmatpush1.msra.mxu0 0.0
        %650 = vmatprep.subr.mxu0 0.0
        %651 = vmatpush1.msra.mxu0 0.0
        %652 = vmatprep.subr.mxu0 0.0
        %653 = vmatpush1.msra.mxu0 0.0
        %654 = vmatprep.subr.mxu0 0.0
        %655 = vmatpush1.msra.mxu0 0.0
        %656 = vmatprep.subr.mxu0 0.0
        %657 = vmatpush1.msra.mxu0 0.0
        %658 = vmatprep.subr.mxu0 0.0
        %659 = vmatpush1.msra.mxu0 0.0
        %660 = vmatprep.subr.mxu0 0.0
        %661 = vmatpush1.msra.mxu0 0.0
        %662 = vmatprep.subr.mxu0 0.0
        %663 = vmatpush1.msra.mxu0 0.0
        %664 = vmatprep.subr.mxu0 0.0
        %665 = vmatpush1.msra.mxu0 0.0
        %666 = vmatprep.subr.mxu0 0.0
        %667 = vmatpush1.msra.mxu0 0.0
        %668 = vmatprep.subr.mxu0 0.0
        %669 = vmatpush1.msra.mxu0 0.0
        %670 = vmatprep.subr.mxu0 0.0
        %671 = vmatpush1.msra.mxu0 0.0
        %672 = vmatprep.subr.mxu0 0.0
        %673 = vmatpush1.msra.mxu0 0.0
        %674 = vmatprep.subr.mxu0 0.0
        %675 = vmatpush1.msra.mxu0 0.0
        %676 = vmatprep.subr.mxu0 0.0
        %677 = vmatpush1.msra.mxu0 0.0
        %678 = vmatprep.subr.mxu0 0.0
        %679 = vmatpush1.msra.mxu0 0.0
        %680 = vmatprep.subr.mxu0 0.0
        %681 = vmatpush1.msra.mxu0 0.0
        %682 = vmatprep.subr.mxu0 0.0
        %683 = vmatpush1.msra.mxu0 0.0
        %684 = vmatprep.subr.mxu0 0.0
        %685 = vmatpush1.msra.mxu0 0.0
        %686 = vmatprep.subr.mxu0 0.0
        %687 = vmatpush1.msra.mxu0 0.0
        %688 = vmatprep.mubr.f32.mxu0 0.0
        %689 = vmatmul.mubr.f32.gmra.mrb[0].mxu0 %v379
        %v690 = vpop.f32.mrb[0].mxu0
        %v691 = vadd.f32 %v601, %v690
        %v692 = vpop.f32.mrb[0].mxu0
        %v693 = vadd.f32 %v601, %v692
        %694 = vmatprep.mubr.f32.mxu0 0.0
        %695 = vmatmul.mubr.f32.gmra.mrb[0].mxu0 %v382
        %v696 = vpop.f32.mrb[0].mxu0
        %v697 = vadd.f32 %v606, %v696
        %v698 = vpop.f32.mrb[0].mxu0
        %v699 = vadd.f32 %v606, %v698
        %700 = vmatprep.mubr.f32.mxu0 0.0
        %701 = vmatmul.mubr.f32.gmra.mrb[0].mxu0 %v385
        %v702 = vpop.f32.mrb[0].mxu0
        %v703 = vadd.f32 %v611, %v702
        %v704 = vpop.f32.mrb[0].mxu0
        %v705 = vadd.f32 %v611, %v704
        %706 = vmatprep.mubr.f32.mxu0 0.0
        %707 = vmatmul.mubr.f32.gmra.mrb[0].mxu0 %v388
        %v708 = vpop.f32.mrb[0].mxu0
        %v709 = vadd.f32 %v616, %v708
        %v710 = vpop.f32.mrb[0].mxu0
        %v711 = vadd.f32 %v616, %v710
        %712 = vdwg.mxu0
        %v713 = vtanh.pop %v691
        %v714 = vtanh.pop %v693
        %v715 = vtanh.pop %v697
        %v716 = vtanh.pop %v699
        %v717 = vtanh.pop %v703
        %v718 = vtanh.pop %v705
        %v719 = vtanh.pop %v709
        %v720 = vtanh.pop %v711
        %721 = vmatprep.subr.mxu0 %v714
        %722 = vmatpush1.msra.mxu0 %v713
        %723 = vmatprep.subr.mxu0 %v716
        %724 = vmatpush1.msra.mxu0 %v715
        %725 = vmatprep.subr.mxu0 %v718
        %726 = vmatpush1.msra.mxu0 %v717
        %727 = vmatprep.subr.mxu0 %v720
        %728 = vmatpush1.msra.mxu0 %v719
        %729 = vmatprep.subr.mxu0 0.0
        %730 = vmatpush1.msra.mxu0 0.0
        %731 = vmatprep.subr.mxu0 0.0
        %732 = vmatpush1.msra.mxu0 0.0
        %733 = vmatprep.subr.mxu0 0.0
        %734 = vmatpush1.msra.mxu0 0.0
        %735 = vmatprep.subr.mxu0 0.0
        %736 = vmatpush1.msra.mxu0 0.0
        %737 = vmatprep.subr.mxu0 0.0
        %738 = vmatpush1.msra.mxu0 0.0
        %739 = vmatprep.subr.mxu0 0.0
        %740 = vmatpush1.msra.mxu0 0.0
        %741 = vmatprep.subr.mxu0 0.0
        %742 = vmatpush1.msra.mxu0 0.0
        %743 = vmatprep.subr.mxu0 0.0
        %744 = vmatpush1.msra.mxu0 0.0
        %745 = vmatprep.subr.mxu0 0.0
        %746 = vmatpush1.msra.mxu0 0.0
        %747 = vmatprep.subr.mxu0 0.0
        %748 = vmatpush1.msra.mxu0 0.0
        %749 = vmatprep.subr.mxu0 0.0
        %750 = vmatpush1.msra.mxu0 0.0
        %751 = vmatprep.subr.mxu0 0.0
        %752 = vmatpush1.msra.mxu0 0.0
        %753 = vmatprep.subr.mxu0 0.0
        %754 = vmatpush1.msra.mxu0 0.0
        %755 = vmatprep.subr.mxu0 0.0
        %756 = vmatpush1.msra.mxu0 0.0
        %757 = vmatprep.subr.mxu0 0.0
        %758 = vmatpush1.msra.mxu0 0.0
        %759 = vmatprep.subr.mxu0 0.0
        %760 = vmatpush1.msra.mxu0 0.0
        %761 = vmatprep.subr.mxu0 0.0
        %762 = vmatpush1.msra.mxu0 0.0
        %763 = vmatprep.subr.mxu0 0.0
        %764 = vmatpush1.msra.mxu0 0.0
        %765 = vmatprep.subr.mxu0 0.0
        %766 = vmatpush1.msra.mxu0 0.0
        %767 = vmatprep.subr.mxu0 0.0
        %768 = vmatpush1.msra.mxu0 0.0
        %769 = vmatprep.subr.mxu0 0.0
        %770 = vmatpush1.msra.mxu0 0.0
        %771 = vmatprep.subr.mxu0 0.0
        %772 = vmatpush1.msra.mxu0 0.0
        %773 = vmatprep.subr.mxu0 0.0
        %774 = vmatpush1.msra.mxu0 0.0
        %775 = vmatprep.subr.mxu0 0.0
        %776 = vmatpush1.msra.mxu0 0.0
        %777 = vmatprep.subr.mxu0 0.0
        %778 = vmatpush1.msra.mxu0 0.0
        %779 = vmatprep.subr.mxu0 0.0
        %780 = vmatpush1.msra.mxu0 0.0
        %781 = vmatprep.subr.mxu0 0.0
        %782 = vmatpush1.msra.mxu0 0.0
        %783 = vmatprep.subr.mxu0 0.0
        %784 = vmatpush1.msra.mxu0 0.0
        %785 = vmatprep.mubr.f32.mxu0 0.0
        %786 = vmatmul.mubr.f32.gmra.mrb[0].mxu0 %v494
        %v787 = vpop.f32.mrb[0].mxu0
        %v788 = vadd.f32 0.0, %v787
        %v789 = vpop.f32.mrb[0].mxu0
        %v790 = vadd.f32 0.0, %v789
        %791 = vdwg.mxu0
        %s792 = sld [smem:[#allocation2 + $0x1]]
        %v793 = vstv %s792
        %v794 = vmul.f32 %v793, %v592
        %s795 = sld [smem:[#allocation4 + $0x1]]
        %v796 = vstv %s795
        %v797 = vmul.f32 %v796, %v788
        %v798 = vmul.f32 %v796, %v790
        %v801 = vcombine.low %v797, %v798
        %v803 = vadd.f32 %v794, %v801
        %s804 = scalar_lea.vmem %s6, 4
        %v805 = vld [vmem:[%s804] sm:$0xf]
        %807 = vset.pattern.permute.xlu0 0
        %808 = vperm.xlu0 %807, %v805
        %v809 = vpop.permute.xlu0 %808
        %v811 = vunpack.c.l.s4 839922192
        %v812 = vunpack.c.0.s8 %v811
        %v813 = vlaneseq
        %v814 = vshrl.u32 %v813, 7
        %v815 = vsub.s32 %v812, %v814
        %v816 = vrot.slane %v809, %v815
        %v818 = vadd.f32 %v803, %v816
        %s819 = scalar_lea.vmem %s4, 64
        %v820 = vld [vmem:[%s819] sm:$0xff]
        %v821 = vld [vmem:[%s819 + $0x8] sm:$0xff]
        %v822 = vld [vmem:[%s819 + $0x10] sm:$0xff]
        %v823 = vld [vmem:[%s819 + $0x18] sm:$0xff]
        %825 = vset.pattern.permute.xlu0 0
        %826 = vperm.xlu0 %825, %v820
        %v827 = vpop.permute.xlu0 %826
        %830 = vset.pattern.permute.xlu0 0
        %831 = vperm.xlu0 %830, %v821
        %v832 = vpop.permute.xlu0 %831
        %835 = vset.pattern.permute.xlu0 0
        %836 = vperm.xlu0 %835, %v822
        %v837 = vpop.permute.xlu0 %836
        %840 = vset.pattern.permute.xlu0 0
        %841 = vperm.xlu0 %840, %v823
        %v842 = vpop.permute.xlu0 %841
        %v845 = vcombine.high %v818, %v818
        %v846 = vsel %vm390, %v818, 0
        %v848 = vsel %vm390, %v845, 0
        %850 = vmatprep.subr.mxu0 %v848
        %851 = vmatpush1.msra.mxu0 %v846
        %852 = vmatprep.subr.mxu0 0.0
        %853 = vmatpush1.msra.mxu0 0.0
        %854 = vmatprep.subr.mxu0 0.0
        %855 = vmatpush1.msra.mxu0 0.0
        %856 = vmatprep.subr.mxu0 0.0
        %857 = vmatpush1.msra.mxu0 0.0
        %858 = vmatprep.subr.mxu0 0.0
        %859 = vmatpush1.msra.mxu0 0.0
        %860 = vmatprep.subr.mxu0 0.0
        %861 = vmatpush1.msra.mxu0 0.0
        %862 = vmatprep.subr.mxu0 0.0
        %863 = vmatpush1.msra.mxu0 0.0
        %864 = vmatprep.subr.mxu0 0.0
        %865 = vmatpush1.msra.mxu0 0.0
        %866 = vmatprep.subr.mxu0 0.0
        %867 = vmatpush1.msra.mxu0 0.0
        %868 = vmatprep.subr.mxu0 0.0
        %869 = vmatpush1.msra.mxu0 0.0
        %870 = vmatprep.subr.mxu0 0.0
        %871 = vmatpush1.msra.mxu0 0.0
        %872 = vmatprep.subr.mxu0 0.0
        %873 = vmatpush1.msra.mxu0 0.0
        %874 = vmatprep.subr.mxu0 0.0
        %875 = vmatpush1.msra.mxu0 0.0
        %876 = vmatprep.subr.mxu0 0.0
        %877 = vmatpush1.msra.mxu0 0.0
        %878 = vmatprep.subr.mxu0 0.0
        %879 = vmatpush1.msra.mxu0 0.0
        %880 = vmatprep.subr.mxu0 0.0
        %881 = vmatpush1.msra.mxu0 0.0
        %882 = vmatprep.subr.mxu0 0.0
        %883 = vmatpush1.msra.mxu0 0.0
        %884 = vmatprep.subr.mxu0 0.0
        %885 = vmatpush1.msra.mxu0 0.0
        %886 = vmatprep.subr.mxu0 0.0
        %887 = vmatpush1.msra.mxu0 0.0
        %888 = vmatprep.subr.mxu0 0.0
        %889 = vmatpush1.msra.mxu0 0.0
        %890 = vmatprep.subr.mxu0 0.0
        %891 = vmatpush1.msra.mxu0 0.0
        %892 = vmatprep.subr.mxu0 0.0
        %893 = vmatpush1.msra.mxu0 0.0
        %894 = vmatprep.subr.mxu0 0.0
        %895 = vmatpush1.msra.mxu0 0.0
        %896 = vmatprep.subr.mxu0 0.0
        %897 = vmatpush1.msra.mxu0 0.0
        %898 = vmatprep.subr.mxu0 0.0
        %899 = vmatpush1.msra.mxu0 0.0
        %900 = vmatprep.subr.mxu0 0.0
        %901 = vmatpush1.msra.mxu0 0.0
        %902 = vmatprep.subr.mxu0 0.0
        %903 = vmatpush1.msra.mxu0 0.0
        %904 = vmatprep.subr.mxu0 0.0
        %905 = vmatpush1.msra.mxu0 0.0
        %906 = vmatprep.subr.mxu0 0.0
        %907 = vmatpush1.msra.mxu0 0.0
        %908 = vmatprep.subr.mxu0 0.0
        %909 = vmatpush1.msra.mxu0 0.0
        %910 = vmatprep.subr.mxu0 0.0
        %911 = vmatpush1.msra.mxu0 0.0
        %912 = vmatprep.subr.mxu0 0.0
        %913 = vmatpush1.msra.mxu0 0.0
        %914 = vmatprep.mubr.f32.mxu0 0.0
        %915 = vmatmul.mubr.f32.gmra.mrb[0].mxu0 %v379
        %v916 = vpop.f32.mrb[0].mxu0
        %v917 = vadd.f32 %v827, %v916
        %v918 = vpop.f32.mrb[0].mxu0
        %v919 = vadd.f32 %v827, %v918
        %920 = vmatprep.mubr.f32.mxu0 0.0
        %921 = vmatmul.mubr.f32.gmra.mrb[0].mxu0 %v382
        %v922 = vpop.f32.mrb[0].mxu0
        %v923 = vadd.f32 %v832, %v922
        %v924 = vpop.f32.mrb[0].mxu0
        %v925 = vadd.f32 %v832, %v924
        %926 = vmatprep.mubr.f32.mxu0 0.0
        %927 = vmatmul.mubr.f32.gmra.mrb[0].mxu0 %v385
        %v928 = vpop.f32.mrb[0].mxu0
        %v929 = vadd.f32 %v837, %v928
        %v930 = vpop.f32.mrb[0].mxu0
        %v931 = vadd.f32 %v837, %v930
        %932 = vmatprep.mubr.f32.mxu0 0.0
        %933 = vmatmul.mubr.f32.gmra.mrb[0].mxu0 %v388
        %v934 = vpop.f32.mrb[0].mxu0
        %v935 = vadd.f32 %v842, %v934
        %v936 = vpop.f32.mrb[0].mxu0
        %v937 = vadd.f32 %v842, %v936
        %938 = vdwg.mxu0
        %v939 = vtanh.pop %v917
        %v940 = vtanh.pop %v919
        %v941 = vtanh.pop %v923
        %v942 = vtanh.pop %v925
        %v943 = vtanh.pop %v929
        %v944 = vtanh.pop %v931
        %v945 = vtanh.pop %v935
        %v946 = vtanh.pop %v937
        %947 = vmatprep.subr.mxu0 %v940
        %948 = vmatpush1.msra.mxu0 %v939
        %949 = vmatprep.subr.mxu0 %v942
        %950 = vmatpush1.msra.mxu0 %v941
        %951 = vmatprep.subr.mxu0 %v944
        %952 = vmatpush1.msra.mxu0 %v943
        %953 = vmatprep.subr.mxu0 %v946
        %954 = vmatpush1.msra.mxu0 %v945
        %955 = vmatprep.subr.mxu0 0.0
        %956 = vmatpush1.msra.mxu0 0.0
        %957 = vmatprep.subr.mxu0 0.0
        %958 = vmatpush1.msra.mxu0 0.0
        %959 = vmatprep.subr.mxu0 0.0
        %960 = vmatpush1.msra.mxu0 0.0
        %961 = vmatprep.subr.mxu0 0.0
        %962 = vmatpush1.msra.mxu0 0.0
        %963 = vmatprep.subr.mxu0 0.0
        %964 = vmatpush1.msra.mxu0 0.0
        %965 = vmatprep.subr.mxu0 0.0
        %966 = vmatpush1.msra.mxu0 0.0
        %967 = vmatprep.subr.mxu0 0.0
        %968 = vmatpush1.msra.mxu0 0.0
        %969 = vmatprep.subr.mxu0 0.0
        %970 = vmatpush1.msra.mxu0 0.0
        %971 = vmatprep.subr.mxu0 0.0
        %972 = vmatpush1.msra.mxu0 0.0
        %973 = vmatprep.subr.mxu0 0.0
        %974 = vmatpush1.msra.mxu0 0.0
        %975 = vmatprep.subr.mxu0 0.0
        %976 = vmatpush1.msra.mxu0 0.0
        %977 = vmatprep.subr.mxu0 0.0
        %978 = vmatpush1.msra.mxu0 0.0
        %979 = vmatprep.subr.mxu0 0.0
        %980 = vmatpush1.msra.mxu0 0.0
        %981 = vmatprep.subr.mxu0 0.0
        %982 = vmatpush1.msra.mxu0 0.0
        %983 = vmatprep.subr.mxu0 0.0
        %984 = vmatpush1.msra.mxu0 0.0
        %985 = vmatprep.subr.mxu0 0.0
        %986 = vmatpush1.msra.mxu0 0.0
        %987 = vmatprep.subr.mxu0 0.0
        %988 = vmatpush1.msra.mxu0 0.0
        %989 = vmatprep.subr.mxu0 0.0
        %990 = vmatpush1.msra.mxu0 0.0
        %991 = vmatprep.subr.mxu0 0.0
        %992 = vmatpush1.msra.mxu0 0.0
        %993 = vmatprep.subr.mxu0 0.0
        %994 = vmatpush1.msra.mxu0 0.0
        %995 = vmatprep.subr.mxu0 0.0
        %996 = vmatpush1.msra.mxu0 0.0
        %997 = vmatprep.subr.mxu0 0.0
        %998 = vmatpush1.msra.mxu0 0.0
        %999 = vmatprep.subr.mxu0 0.0
        %1000 = vmatpush1.msra.mxu0 0.0
        %1001 = vmatprep.subr.mxu0 0.0
        %1002 = vmatpush1.msra.mxu0 0.0
        %1003 = vmatprep.subr.mxu0 0.0
        %1004 = vmatpush1.msra.mxu0 0.0
        %1005 = vmatprep.subr.mxu0 0.0
        %1006 = vmatpush1.msra.mxu0 0.0
        %1007 = vmatprep.subr.mxu0 0.0
        %1008 = vmatpush1.msra.mxu0 0.0
        %1009 = vmatprep.subr.mxu0 0.0
        %1010 = vmatpush1.msra.mxu0 0.0
        %1011 = vmatprep.mubr.f32.mxu0 0.0
        %1012 = vmatmul.mubr.f32.gmra.mrb[0].mxu0 %v494
        %v1013 = vpop.f32.mrb[0].mxu0
        %v1014 = vadd.f32 0.0, %v1013
        %v1015 = vpop.f32.mrb[0].mxu0
        %v1016 = vadd.f32 0.0, %v1015
        %1017 = vdwg.mxu0
        %s1018 = sld [smem:[#allocation2 + $0x2]]
        %v1019 = vstv %s1018
        %v1020 = vmul.f32 %v1019, %v818
        %s1021 = sld [smem:[#allocation4 + $0x2]]
        %v1022 = vstv %s1021
        %v1023 = vmul.f32 %v1022, %v1014
        %v1024 = vmul.f32 %v1022, %v1016
        %v1027 = vcombine.low %v1023, %v1024
        %v1029 = vadd.f32 %v1020, %v1027
        %s1030 = scalar_lea.vmem %s6, 8
        %v1031 = vld [vmem:[%s1030] sm:$0xf]
        %1033 = vset.pattern.permute.xlu0 0
        %1034 = vperm.xlu0 %1033, %v1031
        %v1035 = vpop.permute.xlu0 %1034
        %v1037 = vunpack.c.l.s4 839922192
        %v1038 = vunpack.c.0.s8 %v1037
        %v1039 = vlaneseq
        %v1040 = vshrl.u32 %v1039, 7
        %v1041 = vsub.s32 %v1038, %v1040
        %v1042 = vrot.slane %v1035, %v1041
        %v1044 = vadd.f32 %v1029, %v1042
        %s1045 = scalar_lea.vmem %s4, 96
        %v1046 = vld [vmem:[%s1045] sm:$0xff]
        %v1047 = vld [vmem:[%s1045 + $0x8] sm:$0xff]
        %v1048 = vld [vmem:[%s1045 + $0x10] sm:$0xff]
        %v1049 = vld [vmem:[%s1045 + $0x18] sm:$0xff]
        %1051 = vset.pattern.permute.xlu0 0
        %1052 = vperm.xlu0 %1051, %v1046
        %v1053 = vpop.permute.xlu0 %1052
        %1056 = vset.pattern.permute.xlu0 0
        %1057 = vperm.xlu0 %1056, %v1047
        %v1058 = vpop.permute.xlu0 %1057
        %1061 = vset.pattern.permute.xlu0 0
        %1062 = vperm.xlu0 %1061, %v1048
        %v1063 = vpop.permute.xlu0 %1062
        %1066 = vset.pattern.permute.xlu0 0
        %1067 = vperm.xlu0 %1066, %v1049
        %v1068 = vpop.permute.xlu0 %1067
        %v1071 = vcombine.high %v1044, %v1044
        %v1072 = vsel %vm390, %v1044, 0
        %v1074 = vsel %vm390, %v1071, 0
        %1076 = vmatprep.subr.mxu0 %v1074
        %1077 = vmatpush1.msra.mxu0 %v1072
        %1078 = vmatprep.subr.mxu0 0.0
        %1079 = vmatpush1.msra.mxu0 0.0
        %1080 = vmatprep.subr.mxu0 0.0
        %1081 = vmatpush1.msra.mxu0 0.0
        %1082 = vmatprep.subr.mxu0 0.0
        %1083 = vmatpush1.msra.mxu0 0.0
        %1084 = vmatprep.subr.mxu0 0.0
        %1085 = vmatpush1.msra.mxu0 0.0
        %1086 = vmatprep.subr.mxu0 0.0
        %1087 = vmatpush1.msra.mxu0 0.0
        %1088 = vmatprep.subr.mxu0 0.0
        %1089 = vmatpush1.msra.mxu0 0.0
        %1090 = vmatprep.subr.mxu0 0.0
        %1091 = vmatpush1.msra.mxu0 0.0
        %1092 = vmatprep.subr.mxu0 0.0
        %1093 = vmatpush1.msra.mxu0 0.0
        %1094 = vmatprep.subr.mxu0 0.0
        %1095 = vmatpush1.msra.mxu0 0.0
        %1096 = vmatprep.subr.mxu0 0.0
        %1097 = vmatpush1.msra.mxu0 0.0
        %1098 = vmatprep.subr.mxu0 0.0
        %1099 = vmatpush1.msra.mxu0 0.0
        %1100 = vmatprep.subr.mxu0 0.0
        %1101 = vmatpush1.msra.mxu0 0.0
        %1102 = vmatprep.subr.mxu0 0.0
        %1103 = vmatpush1.msra.mxu0 0.0
        %1104 = vmatprep.subr.mxu0 0.0
        %1105 = vmatpush1.msra.mxu0 0.0
        %1106 = vmatprep.subr.mxu0 0.0
        %1107 = vmatpush1.msra.mxu0 0.0
        %1108 = vmatprep.subr.mxu0 0.0
        %1109 = vmatpush1.msra.mxu0 0.0
        %1110 = vmatprep.subr.mxu0 0.0
        %1111 = vmatpush1.msra.mxu0 0.0
        %1112 = vmatprep.subr.mxu0 0.0
        %1113 = vmatpush1.msra.mxu0 0.0
        %1114 = vmatprep.subr.mxu0 0.0
        %1115 = vmatpush1.msra.mxu0 0.0
        %1116 = vmatprep.subr.mxu0 0.0
        %1117 = vmatpush1.msra.mxu0 0.0
        %1118 = vmatprep.subr.mxu0 0.0
        %1119 = vmatpush1.msra.mxu0 0.0
        %1120 = vmatprep.subr.mxu0 0.0
        %1121 = vmatpush1.msra.mxu0 0.0
        %1122 = vmatprep.subr.mxu0 0.0
        %1123 = vmatpush1.msra.mxu0 0.0
        %1124 = vmatprep.subr.mxu0 0.0
        %1125 = vmatpush1.msra.mxu0 0.0
        %1126 = vmatprep.subr.mxu0 0.0
        %1127 = vmatpush1.msra.mxu0 0.0
        %1128 = vmatprep.subr.mxu0 0.0
        %1129 = vmatpush1.msra.mxu0 0.0
        %1130 = vmatprep.subr.mxu0 0.0
        %1131 = vmatpush1.msra.mxu0 0.0
        %1132 = vmatprep.subr.mxu0 0.0
        %1133 = vmatpush1.msra.mxu0 0.0
        %1134 = vmatprep.subr.mxu0 0.0
        %1135 = vmatpush1.msra.mxu0 0.0
        %1136 = vmatprep.subr.mxu0 0.0
        %1137 = vmatpush1.msra.mxu0 0.0
        %1138 = vmatprep.subr.mxu0 0.0
        %1139 = vmatpush1.msra.mxu0 0.0
        %1140 = vmatprep.mubr.f32.mxu0 0.0
        %1141 = vmatmul.mubr.f32.gmra.mrb[0].mxu0 %v379
        %v1142 = vpop.f32.mrb[0].mxu0
        %v1143 = vadd.f32 %v1053, %v1142
        %v1144 = vpop.f32.mrb[0].mxu0
        %v1145 = vadd.f32 %v1053, %v1144
        %1146 = vmatprep.mubr.f32.mxu0 0.0
        %1147 = vmatmul.mubr.f32.gmra.mrb[0].mxu0 %v382
        %v1148 = vpop.f32.mrb[0].mxu0
        %v1149 = vadd.f32 %v1058, %v1148
        %v1150 = vpop.f32.mrb[0].mxu0
        %v1151 = vadd.f32 %v1058, %v1150
        %1152 = vmatprep.mubr.f32.mxu0 0.0
        %1153 = vmatmul.mubr.f32.gmra.mrb[0].mxu0 %v385
        %v1154 = vpop.f32.mrb[0].mxu0
        %v1155 = vadd.f32 %v1063, %v1154
        %v1156 = vpop.f32.mrb[0].mxu0
        %v1157 = vadd.f32 %v1063, %v1156
        %1158 = vmatprep.mubr.f32.mxu0 0.0
        %1159 = vmatmul.mubr.f32.gmra.mrb[0].mxu0 %v388
        %v1160 = vpop.f32.mrb[0].mxu0
        %v1161 = vadd.f32 %v1068, %v1160
        %v1162 = vpop.f32.mrb[0].mxu0
        %v1163 = vadd.f32 %v1068, %v1162
        %1164 = vdwg.mxu0
        %v1165 = vtanh.pop %v1143
        %v1166 = vtanh.pop %v1145
        %v1167 = vtanh.pop %v1149
        %v1168 = vtanh.pop %v1151
        %v1169 = vtanh.pop %v1155
        %v1170 = vtanh.pop %v1157
        %v1171 = vtanh.pop %v1161
        %v1172 = vtanh.pop %v1163
        %1173 = vmatprep.subr.mxu0 %v1166
        %1174 = vmatpush1.msra.mxu0 %v1165
        %1175 = vmatprep.subr.mxu0 %v1168
        %1176 = vmatpush1.msra.mxu0 %v1167
        %1177 = vmatprep.subr.mxu0 %v1170
        %1178 = vmatpush1.msra.mxu0 %v1169
        %1179 = vmatprep.subr.mxu0 %v1172
        %1180 = vmatpush1.msra.mxu0 %v1171
        %1181 = vmatprep.subr.mxu0 0.0
        %1182 = vmatpush1.msra.mxu0 0.0
        %1183 = vmatprep.subr.mxu0 0.0
        %1184 = vmatpush1.msra.mxu0 0.0
        %1185 = vmatprep.subr.mxu0 0.0
        %1186 = vmatpush1.msra.mxu0 0.0
        %1187 = vmatprep.subr.mxu0 0.0
        %1188 = vmatpush1.msra.mxu0 0.0
        %1189 = vmatprep.subr.mxu0 0.0
        %1190 = vmatpush1.msra.mxu0 0.0
        %1191 = vmatprep.subr.mxu0 0.0
        %1192 = vmatpush1.msra.mxu0 0.0
        %1193 = vmatprep.subr.mxu0 0.0
        %1194 = vmatpush1.msra.mxu0 0.0
        %1195 = vmatprep.subr.mxu0 0.0
        %1196 = vmatpush1.msra.mxu0 0.0
        %1197 = vmatprep.subr.mxu0 0.0
        %1198 = vmatpush1.msra.mxu0 0.0
        %1199 = vmatprep.subr.mxu0 0.0
        %1200 = vmatpush1.msra.mxu0 0.0
        %1201 = vmatprep.subr.mxu0 0.0
        %1202 = vmatpush1.msra.mxu0 0.0
        %1203 = vmatprep.subr.mxu0 0.0
        %1204 = vmatpush1.msra.mxu0 0.0
        %1205 = vmatprep.subr.mxu0 0.0
        %1206 = vmatpush1.msra.mxu0 0.0
        %1207 = vmatprep.subr.mxu0 0.0
        %1208 = vmatpush1.msra.mxu0 0.0
        %1209 = vmatprep.subr.mxu0 0.0
        %1210 = vmatpush1.msra.mxu0 0.0
        %1211 = vmatprep.subr.mxu0 0.0
        %1212 = vmatpush1.msra.mxu0 0.0
        %1213 = vmatprep.subr.mxu0 0.0
        %1214 = vmatpush1.msra.mxu0 0.0
        %1215 = vmatprep.subr.mxu0 0.0
        %1216 = vmatpush1.msra.mxu0 0.0
        %1217 = vmatprep.subr.mxu0 0.0
        %1218 = vmatpush1.msra.mxu0 0.0
        %1219 = vmatprep.subr.mxu0 0.0
        %1220 = vmatpush1.msra.mxu0 0.0
        %1221 = vmatprep.subr.mxu0 0.0
        %1222 = vmatpush1.msra.mxu0 0.0
        %1223 = vmatprep.subr.mxu0 0.0
        %1224 = vmatpush1.msra.mxu0 0.0
        %1225 = vmatprep.subr.mxu0 0.0
        %1226 = vmatpush1.msra.mxu0 0.0
        %1227 = vmatprep.subr.mxu0 0.0
        %1228 = vmatpush1.msra.mxu0 0.0
        %1229 = vmatprep.subr.mxu0 0.0
        %1230 = vmatpush1.msra.mxu0 0.0
        %1231 = vmatprep.subr.mxu0 0.0
        %1232 = vmatpush1.msra.mxu0 0.0
        %1233 = vmatprep.subr.mxu0 0.0
        %1234 = vmatpush1.msra.mxu0 0.0
        %1235 = vmatprep.subr.mxu0 0.0
        %1236 = vmatpush1.msra.mxu0 0.0
        %1237 = vmatprep.mubr.f32.mxu0 0.0
        %1238 = vmatmul.mubr.f32.gmra.mrb[0].mxu0 %v494
        %v1239 = vpop.f32.mrb[0].mxu0
        %v1240 = vadd.f32 0.0, %v1239
        %v1241 = vpop.f32.mrb[0].mxu0
        %v1242 = vadd.f32 0.0, %v1241
        %1243 = vdwg.mxu0
        %s1244 = sld [smem:[#allocation2 + $0x3]]
        %v1245 = vstv %s1244
        %v1246 = vmul.f32 %v1245, %v1044
        %s1247 = sld [smem:[#allocation4 + $0x3]]
        %v1248 = vstv %s1247
        %v1249 = vmul.f32 %v1248, %v1240
        %v1250 = vmul.f32 %v1248, %v1242
        %v1253 = vcombine.low %v1249, %v1250
        %v1255 = vadd.f32 %v1246, %v1253
        %s1256 = scalar_lea.vmem %s6, 12
        %v1257 = vld [vmem:[%s1256] sm:$0xf]
        %1259 = vset.pattern.permute.xlu0 0
        %1260 = vperm.xlu0 %1259, %v1257
        %v1261 = vpop.permute.xlu0 %1260
        %v1263 = vunpack.c.l.s4 839922192
        %v1264 = vunpack.c.0.s8 %v1263
        %v1265 = vlaneseq
        %v1266 = vshrl.u32 %v1265, 7
        %v1267 = vsub.s32 %v1264, %v1266
        %v1268 = vrot.slane %v1261, %v1267
        %v1270 = vadd.f32 %v1255, %v1268
        %s1271 = scalar_lea.vmem %s4, 128
        %v1272 = vld [vmem:[%s1271] sm:$0xff]
        %v1273 = vld [vmem:[%s1271 + $0x8] sm:$0xff]
        %v1274 = vld [vmem:[%s1271 + $0x10] sm:$0xff]
        %v1275 = vld [vmem:[%s1271 + $0x18] sm:$0xff]
        %1277 = vset.pattern.permute.xlu0 0
        %1278 = vperm.xlu0 %1277, %v1272
        %v1279 = vpop.permute.xlu0 %1278
        %1282 = vset.pattern.permute.xlu0 0
        %1283 = vperm.xlu0 %1282, %v1273
        %v1284 = vpop.permute.xlu0 %1283
        %1287 = vset.pattern.permute.xlu0 0
        %1288 = vperm.xlu0 %1287, %v1274
        %v1289 = vpop.permute.xlu0 %1288
        %1292 = vset.pattern.permute.xlu0 0
        %1293 = vperm.xlu0 %1292, %v1275
        %v1294 = vpop.permute.xlu0 %1293
        %v1297 = vcombine.high %v1270, %v1270
        %v1298 = vsel %vm390, %v1270, 0
        %v1300 = vsel %vm390, %v1297, 0
        %1302 = vmatprep.subr.mxu0 %v1300
        %1303 = vmatpush1.msra.mxu0 %v1298
        %1304 = vmatprep.subr.mxu0 0.0
        %1305 = vmatpush1.msra.mxu0 0.0
        %1306 = vmatprep.subr.mxu0 0.0
        %1307 = vmatpush1.msra.mxu0 0.0
        %1308 = vmatprep.subr.mxu0 0.0
        %1309 = vmatpush1.msra.mxu0 0.0
        %1310 = vmatprep.subr.mxu0 0.0
        %1311 = vmatpush1.msra.mxu0 0.0
        %1312 = vmatprep.subr.mxu0 0.0
        %1313 = vmatpush1.msra.mxu0 0.0
        %1314 = vmatprep.subr.mxu0 0.0
        %1315 = vmatpush1.msra.mxu0 0.0
        %1316 = vmatprep.subr.mxu0 0.0
        %1317 = vmatpush1.msra.mxu0 0.0
        %1318 = vmatprep.subr.mxu0 0.0
        %1319 = vmatpush1.msra.mxu0 0.0
        %1320 = vmatprep.subr.mxu0 0.0
        %1321 = vmatpush1.msra.mxu0 0.0
        %1322 = vmatprep.subr.mxu0 0.0
        %1323 = vmatpush1.msra.mxu0 0.0
        %1324 = vmatprep.subr.mxu0 0.0
        %1325 = vmatpush1.msra.mxu0 0.0
        %1326 = vmatprep.subr.mxu0 0.0
        %1327 = vmatpush1.msra.mxu0 0.0
        %1328 = vmatprep.subr.mxu0 0.0
        %1329 = vmatpush1.msra.mxu0 0.0
        %1330 = vmatprep.subr.mxu0 0.0
        %1331 = vmatpush1.msra.mxu0 0.0
        %1332 = vmatprep.subr.mxu0 0.0
        %1333 = vmatpush1.msra.mxu0 0.0
        %1334 = vmatprep.subr.mxu0 0.0
        %1335 = vmatpush1.msra.mxu0 0.0
        %1336 = vmatprep.subr.mxu0 0.0
        %1337 = vmatpush1.msra.mxu0 0.0
        %1338 = vmatprep.subr.mxu0 0.0
        %1339 = vmatpush1.msra.mxu0 0.0
        %1340 = vmatprep.subr.mxu0 0.0
        %1341 = vmatpush1.msra.mxu0 0.0
        %1342 = vmatprep.subr.mxu0 0.0
        %1343 = vmatpush1.msra.mxu0 0.0
        %1344 = vmatprep.subr.mxu0 0.0
        %1345 = vmatpush1.msra.mxu0 0.0
        %1346 = vmatprep.subr.mxu0 0.0
        %1347 = vmatpush1.msra.mxu0 0.0
        %1348 = vmatprep.subr.mxu0 0.0
        %1349 = vmatpush1.msra.mxu0 0.0
        %1350 = vmatprep.subr.mxu0 0.0
        %1351 = vmatpush1.msra.mxu0 0.0
        %1352 = vmatprep.subr.mxu0 0.0
        %1353 = vmatpush1.msra.mxu0 0.0
        %1354 = vmatprep.subr.mxu0 0.0
        %1355 = vmatpush1.msra.mxu0 0.0
        %1356 = vmatprep.subr.mxu0 0.0
        %1357 = vmatpush1.msra.mxu0 0.0
        %1358 = vmatprep.subr.mxu0 0.0
        %1359 = vmatpush1.msra.mxu0 0.0
        %1360 = vmatprep.subr.mxu0 0.0
        %1361 = vmatpush1.msra.mxu0 0.0
        %1362 = vmatprep.subr.mxu0 0.0
        %1363 = vmatpush1.msra.mxu0 0.0
        %1364 = vmatprep.subr.mxu0 0.0
        %1365 = vmatpush1.msra.mxu0 0.0
        %1366 = vmatprep.mubr.f32.mxu0 0.0
        %1367 = vmatmul.mubr.f32.gmra.mrb[0].mxu0 %v379
        %v1368 = vpop.f32.mrb[0].mxu0
        %v1369 = vadd.f32 %v1279, %v1368
        %v1370 = vpop.f32.mrb[0].mxu0
        %v1371 = vadd.f32 %v1279, %v1370
        %1372 = vmatprep.mubr.f32.mxu0 0.0
        %1373 = vmatmul.mubr.f32.gmra.mrb[0].mxu0 %v382
        %v1374 = vpop.f32.mrb[0].mxu0
        %v1375 = vadd.f32 %v1284, %v1374
        %v1376 = vpop.f32.mrb[0].mxu0
        %v1377 = vadd.f32 %v1284, %v1376
        %1378 = vmatprep.mubr.f32.mxu0 0.0
        %1379 = vmatmul.mubr.f32.gmra.mrb[0].mxu0 %v385
        %v1380 = vpop.f32.mrb[0].mxu0
        %v1381 = vadd.f32 %v1289, %v1380
        %v1382 = vpop.f32.mrb[0].mxu0
        %v1383 = vadd.f32 %v1289, %v1382
        %1384 = vmatprep.mubr.f32.mxu0 0.0
        %1385 = vmatmul.mubr.f32.gmra.mrb[0].mxu0 %v388
        %v1386 = vpop.f32.mrb[0].mxu0
        %v1387 = vadd.f32 %v1294, %v1386
        %v1388 = vpop.f32.mrb[0].mxu0
        %v1389 = vadd.f32 %v1294, %v1388
        %1390 = vdwg.mxu0
        %v1391 = vtanh.pop %v1369
        %v1392 = vtanh.pop %v1371
        %v1393 = vtanh.pop %v1375
        %v1394 = vtanh.pop %v1377
        %v1395 = vtanh.pop %v1381
        %v1396 = vtanh.pop %v1383
        %v1397 = vtanh.pop %v1387
        %v1398 = vtanh.pop %v1389
        %1399 = vmatprep.subr.mxu0 %v1392
        %1400 = vmatpush1.msra.mxu0 %v1391
        %1401 = vmatprep.subr.mxu0 %v1394
        %1402 = vmatpush1.msra.mxu0 %v1393
        %1403 = vmatprep.subr.mxu0 %v1396
        %1404 = vmatpush1.msra.mxu0 %v1395
        %1405 = vmatprep.subr.mxu0 %v1398
        %1406 = vmatpush1.msra.mxu0 %v1397
        %1407 = vmatprep.subr.mxu0 0.0
        %1408 = vmatpush1.msra.mxu0 0.0
        %1409 = vmatprep.subr.mxu0 0.0
        %1410 = vmatpush1.msra.mxu0 0.0
        %1411 = vmatprep.subr.mxu0 0.0
        %1412 = vmatpush1.msra.mxu0 0.0
        %1413 = vmatprep.subr.mxu0 0.0
        %1414 = vmatpush1.msra.mxu0 0.0
        %1415 = vmatprep.subr.mxu0 0.0
        %1416 = vmatpush1.msra.mxu0 0.0
        %1417 = vmatprep.subr.mxu0 0.0
        %1418 = vmatpush1.msra.mxu0 0.0
        %1419 = vmatprep.subr.mxu0 0.0
        %1420 = vmatpush1.msra.mxu0 0.0
        %1421 = vmatprep.subr.mxu0 0.0
        %1422 = vmatpush1.msra.mxu0 0.0
        %1423 = vmatprep.subr.mxu0 0.0
        %1424 = vmatpush1.msra.mxu0 0.0
        %1425 = vmatprep.subr.mxu0 0.0
        %1426 = vmatpush1.msra.mxu0 0.0
        %1427 = vmatprep.subr.mxu0 0.0
        %1428 = vmatpush1.msra.mxu0 0.0
        %1429 = vmatprep.subr.mxu0 0.0
        %1430 = vmatpush1.msra.mxu0 0.0
        %1431 = vmatprep.subr.mxu0 0.0
        %1432 = vmatpush1.msra.mxu0 0.0
        %1433 = vmatprep.subr.mxu0 0.0
        %1434 = vmatpush1.msra.mxu0 0.0
        %1435 = vmatprep.subr.mxu0 0.0
        %1436 = vmatpush1.msra.mxu0 0.0
        %1437 = vmatprep.subr.mxu0 0.0
        %1438 = vmatpush1.msra.mxu0 0.0
        %1439 = vmatprep.subr.mxu0 0.0
        %1440 = vmatpush1.msra.mxu0 0.0
        %1441 = vmatprep.subr.mxu0 0.0
        %1442 = vmatpush1.msra.mxu0 0.0
        %1443 = vmatprep.subr.mxu0 0.0
        %1444 = vmatpush1.msra.mxu0 0.0
        %1445 = vmatprep.subr.mxu0 0.0
        %1446 = vmatpush1.msra.mxu0 0.0
        %1447 = vmatprep.subr.mxu0 0.0
        %1448 = vmatpush1.msra.mxu0 0.0
        %1449 = vmatprep.subr.mxu0 0.0
        %1450 = vmatpush1.msra.mxu0 0.0
        %1451 = vmatprep.subr.mxu0 0.0
        %1452 = vmatpush1.msra.mxu0 0.0
        %1453 = vmatprep.subr.mxu0 0.0
        %1454 = vmatpush1.msra.mxu0 0.0
        %1455 = vmatprep.subr.mxu0 0.0
        %1456 = vmatpush1.msra.mxu0 0.0
        %1457 = vmatprep.subr.mxu0 0.0
        %1458 = vmatpush1.msra.mxu0 0.0
        %1459 = vmatprep.subr.mxu0 0.0
        %1460 = vmatpush1.msra.mxu0 0.0
        %1461 = vmatprep.subr.mxu0 0.0
        %1462 = vmatpush1.msra.mxu0 0.0
        %1463 = vmatprep.mubr.f32.mxu0 0.0
        %1464 = vmatmul.mubr.f32.gmra.mrb[0].mxu0 %v494
        %v1465 = vpop.f32.mrb[0].mxu0
        %v1466 = vadd.f32 0.0, %v1465
        %v1467 = vpop.f32.mrb[0].mxu0
        %v1468 = vadd.f32 0.0, %v1467
        %1469 = vdwg.mxu0
        %s1470 = sld [smem:[#allocation2 + $0x4]]
        %v1471 = vstv %s1470
        %v1472 = vmul.f32 %v1471, %v1270
        %s1473 = sld [smem:[#allocation4 + $0x4]]
        %v1474 = vstv %s1473
        %v1475 = vmul.f32 %v1474, %v1466
        %v1476 = vmul.f32 %v1474, %v1468
        %v1479 = vcombine.low %v1475, %v1476
        %v1481 = vadd.f32 %v1472, %v1479
        %s1482 = scalar_lea.vmem %s6, 16
        %v1483 = vld [vmem:[%s1482] sm:$0xf]
        %1485 = vset.pattern.permute.xlu0 0
        %1486 = vperm.xlu0 %1485, %v1483
        %v1487 = vpop.permute.xlu0 %1486
        %v1489 = vunpack.c.l.s4 839922192
        %v1490 = vunpack.c.0.s8 %v1489
        %v1491 = vlaneseq
        %v1492 = vshrl.u32 %v1491, 7
        %v1493 = vsub.s32 %v1490, %v1492
        %v1494 = vrot.slane %v1487, %v1493
        %v1496 = vadd.f32 %v1481, %v1494
        %s1497 = scalar_lea.vmem %s4, 160
        %v1498 = vld [vmem:[%s1497] sm:$0xff]
        %v1499 = vld [vmem:[%s1497 + $0x8] sm:$0xff]
        %v1500 = vld [vmem:[%s1497 + $0x10] sm:$0xff]
        %v1501 = vld [vmem:[%s1497 + $0x18] sm:$0xff]
        %1503 = vset.pattern.permute.xlu0 0
        %1504 = vperm.xlu0 %1503, %v1498
        %v1505 = vpop.permute.xlu0 %1504
        %1508 = vset.pattern.permute.xlu0 0
        %1509 = vperm.xlu0 %1508, %v1499
        %v1510 = vpop.permute.xlu0 %1509
        %1513 = vset.pattern.permute.xlu0 0
        %1514 = vperm.xlu0 %1513, %v1500
        %v1515 = vpop.permute.xlu0 %1514
        %1518 = vset.pattern.permute.xlu0 0
        %1519 = vperm.xlu0 %1518, %v1501
        %v1520 = vpop.permute.xlu0 %1519
        %v1523 = vcombine.high %v1496, %v1496
        %v1524 = vsel %vm390, %v1496, 0
        %v1526 = vsel %vm390, %v1523, 0
        %1528 = vmatprep.subr.mxu0 %v1526
        %1529 = vmatpush1.msra.mxu0 %v1524
        %1530 = vmatprep.subr.mxu0 0.0
        %1531 = vmatpush1.msra.mxu0 0.0
        %1532 = vmatprep.subr.mxu0 0.0
        %1533 = vmatpush1.msra.mxu0 0.0
        %1534 = vmatprep.subr.mxu0 0.0
        %1535 = vmatpush1.msra.mxu0 0.0
        %1536 = vmatprep.subr.mxu0 0.0
        %1537 = vmatpush1.msra.mxu0 0.0
        %1538 = vmatprep.subr.mxu0 0.0
        %1539 = vmatpush1.msra.mxu0 0.0
        %1540 = vmatprep.subr.mxu0 0.0
        %1541 = vmatpush1.msra.mxu0 0.0
        %1542 = vmatprep.subr.mxu0 0.0
        %1543 = vmatpush1.msra.mxu0 0.0
        %1544 = vmatprep.subr.mxu0 0.0
        %1545 = vmatpush1.msra.mxu0 0.0
        %1546 = vmatprep.subr.mxu0 0.0
        %1547 = vmatpush1.msra.mxu0 0.0
        %1548 = vmatprep.subr.mxu0 0.0
        %1549 = vmatpush1.msra.mxu0 0.0
        %1550 = vmatprep.subr.mxu0 0.0
        %1551 = vmatpush1.msra.mxu0 0.0
        %1552 = vmatprep.subr.mxu0 0.0
        %1553 = vmatpush1.msra.mxu0 0.0
        %1554 = vmatprep.subr.mxu0 0.0
        %1555 = vmatpush1.msra.mxu0 0.0
        %1556 = vmatprep.subr.mxu0 0.0
        %1557 = vmatpush1.msra.mxu0 0.0
        %1558 = vmatprep.subr.mxu0 0.0
        %1559 = vmatpush1.msra.mxu0 0.0
        %1560 = vmatprep.subr.mxu0 0.0
        %1561 = vmatpush1.msra.mxu0 0.0
        %1562 = vmatprep.subr.mxu0 0.0
        %1563 = vmatpush1.msra.mxu0 0.0
        %1564 = vmatprep.subr.mxu0 0.0
        %1565 = vmatpush1.msra.mxu0 0.0
        %1566 = vmatprep.subr.mxu0 0.0
        %1567 = vmatpush1.msra.mxu0 0.0
        %1568 = vmatprep.subr.mxu0 0.0
        %1569 = vmatpush1.msra.mxu0 0.0
        %1570 = vmatprep.subr.mxu0 0.0
        %1571 = vmatpush1.msra.mxu0 0.0
        %1572 = vmatprep.subr.mxu0 0.0
        %1573 = vmatpush1.msra.mxu0 0.0
        %1574 = vmatprep.subr.mxu0 0.0
        %1575 = vmatpush1.msra.mxu0 0.0
        %1576 = vmatprep.subr.mxu0 0.0
        %1577 = vmatpush1.msra.mxu0 0.0
        %1578 = vmatprep.subr.mxu0 0.0
        %1579 = vmatpush1.msra.mxu0 0.0
        %1580 = vmatprep.subr.mxu0 0.0
        %1581 = vmatpush1.msra.mxu0 0.0
        %1582 = vmatprep.subr.mxu0 0.0
        %1583 = vmatpush1.msra.mxu0 0.0
        %1584 = vmatprep.subr.mxu0 0.0
        %1585 = vmatpush1.msra.mxu0 0.0
        %1586 = vmatprep.subr.mxu0 0.0
        %1587 = vmatpush1.msra.mxu0 0.0
        %1588 = vmatprep.subr.mxu0 0.0
        %1589 = vmatpush1.msra.mxu0 0.0
        %1590 = vmatprep.subr.mxu0 0.0
        %1591 = vmatpush1.msra.mxu0 0.0
        %1592 = vmatprep.mubr.f32.mxu0 0.0
        %1593 = vmatmul.mubr.f32.gmra.mrb[0].mxu0 %v379
        %v1594 = vpop.f32.mrb[0].mxu0
        %v1595 = vadd.f32 %v1505, %v1594
        %v1596 = vpop.f32.mrb[0].mxu0
        %v1597 = vadd.f32 %v1505, %v1596
        %1598 = vmatprep.mubr.f32.mxu0 0.0
        %1599 = vmatmul.mubr.f32.gmra.mrb[0].mxu0 %v382
        %v1600 = vpop.f32.mrb[0].mxu0
        %v1601 = vadd.f32 %v1510, %v1600
        %v1602 = vpop.f32.mrb[0].mxu0
        %v1603 = vadd.f32 %v1510, %v1602
        %1604 = vmatprep.mubr.f32.mxu0 0.0
        %1605 = vmatmul.mubr.f32.gmra.mrb[0].mxu0 %v385
        %v1606 = vpop.f32.mrb[0].mxu0
        %v1607 = vadd.f32 %v1515, %v1606
        %v1608 = vpop.f32.mrb[0].mxu0
        %v1609 = vadd.f32 %v1515, %v1608
        %1610 = vmatprep.mubr.f32.mxu0 0.0
        %1611 = vmatmul.mubr.f32.gmra.mrb[0].mxu0 %v388
        %v1612 = vpop.f32.mrb[0].mxu0
        %v1613 = vadd.f32 %v1520, %v1612
        %v1614 = vpop.f32.mrb[0].mxu0
        %v1615 = vadd.f32 %v1520, %v1614
        %1616 = vdwg.mxu0
        %v1617 = vtanh.pop %v1595
        %v1618 = vtanh.pop %v1597
        %v1619 = vtanh.pop %v1601
        %v1620 = vtanh.pop %v1603
        %v1621 = vtanh.pop %v1607
        %v1622 = vtanh.pop %v1609
        %v1623 = vtanh.pop %v1613
        %v1624 = vtanh.pop %v1615
        %1625 = vmatprep.subr.mxu0 %v1618
        %1626 = vmatpush1.msra.mxu0 %v1617
        %1627 = vmatprep.subr.mxu0 %v1620
        %1628 = vmatpush1.msra.mxu0 %v1619
        %1629 = vmatprep.subr.mxu0 %v1622
        %1630 = vmatpush1.msra.mxu0 %v1621
        %1631 = vmatprep.subr.mxu0 %v1624
        %1632 = vmatpush1.msra.mxu0 %v1623
        %1633 = vmatprep.subr.mxu0 0.0
        %1634 = vmatpush1.msra.mxu0 0.0
        %1635 = vmatprep.subr.mxu0 0.0
        %1636 = vmatpush1.msra.mxu0 0.0
        %1637 = vmatprep.subr.mxu0 0.0
        %1638 = vmatpush1.msra.mxu0 0.0
        %1639 = vmatprep.subr.mxu0 0.0
        %1640 = vmatpush1.msra.mxu0 0.0
        %1641 = vmatprep.subr.mxu0 0.0
        %1642 = vmatpush1.msra.mxu0 0.0
        %1643 = vmatprep.subr.mxu0 0.0
        %1644 = vmatpush1.msra.mxu0 0.0
        %1645 = vmatprep.subr.mxu0 0.0
        %1646 = vmatpush1.msra.mxu0 0.0
        %1647 = vmatprep.subr.mxu0 0.0
        %1648 = vmatpush1.msra.mxu0 0.0
        %1649 = vmatprep.subr.mxu0 0.0
        %1650 = vmatpush1.msra.mxu0 0.0
        %1651 = vmatprep.subr.mxu0 0.0
        %1652 = vmatpush1.msra.mxu0 0.0
        %1653 = vmatprep.subr.mxu0 0.0
        %1654 = vmatpush1.msra.mxu0 0.0
        %1655 = vmatprep.subr.mxu0 0.0
        %1656 = vmatpush1.msra.mxu0 0.0
        %1657 = vmatprep.subr.mxu0 0.0
        %1658 = vmatpush1.msra.mxu0 0.0
        %1659 = vmatprep.subr.mxu0 0.0
        %1660 = vmatpush1.msra.mxu0 0.0
        %1661 = vmatprep.subr.mxu0 0.0
        %1662 = vmatpush1.msra.mxu0 0.0
        %1663 = vmatprep.subr.mxu0 0.0
        %1664 = vmatpush1.msra.mxu0 0.0
        %1665 = vmatprep.subr.mxu0 0.0
        %1666 = vmatpush1.msra.mxu0 0.0
        %1667 = vmatprep.subr.mxu0 0.0
        %1668 = vmatpush1.msra.mxu0 0.0
        %1669 = vmatprep.subr.mxu0 0.0
        %1670 = vmatpush1.msra.mxu0 0.0
        %1671 = vmatprep.subr.mxu0 0.0
        %1672 = vmatpush1.msra.mxu0 0.0
        %1673 = vmatprep.subr.mxu0 0.0
        %1674 = vmatpush1.msra.mxu0 0.0
        %1675 = vmatprep.subr.mxu0 0.0
        %1676 = vmatpush1.msra.mxu0 0.0
        %1677 = vmatprep.subr.mxu0 0.0
        %1678 = vmatpush1.msra.mxu0 0.0
        %1679 = vmatprep.subr.mxu0 0.0
        %1680 = vmatpush1.msra.mxu0 0.0
        %1681 = vmatprep.subr.mxu0 0.0
        %1682 = vmatpush1.msra.mxu0 0.0
        %1683 = vmatprep.subr.mxu0 0.0
        %1684 = vmatpush1.msra.mxu0 0.0
        %1685 = vmatprep.subr.mxu0 0.0
        %1686 = vmatpush1.msra.mxu0 0.0
        %1687 = vmatprep.subr.mxu0 0.0
        %1688 = vmatpush1.msra.mxu0 0.0
        %1689 = vmatprep.mubr.f32.mxu0 0.0
        %1690 = vmatmul.mubr.f32.gmra.mrb[0].mxu0 %v494
        %v1691 = vpop.f32.mrb[0].mxu0
        %v1692 = vadd.f32 0.0, %v1691
        %v1693 = vpop.f32.mrb[0].mxu0
        %v1694 = vadd.f32 0.0, %v1693
        %1695 = vdwg.mxu0
        %s1696 = sld [smem:[#allocation2 + $0x5]]
        %v1697 = vstv %s1696
        %v1698 = vmul.f32 %v1697, %v1496
        %s1699 = sld [smem:[#allocation4 + $0x5]]
        %v1700 = vstv %s1699
        %v1701 = vmul.f32 %v1700, %v1692
        %v1702 = vmul.f32 %v1700, %v1694
        %v1705 = vcombine.low %v1701, %v1702
        %v1707 = vadd.f32 %v1698, %v1705
        %s1708 = scalar_lea.vmem %s6, 20
        %v1709 = vld [vmem:[%s1708] sm:$0xf]
        %1711 = vset.pattern.permute.xlu0 0
        %1712 = vperm.xlu0 %1711, %v1709
        %v1713 = vpop.permute.xlu0 %1712
        %v1715 = vunpack.c.l.s4 839922192
        %v1716 = vunpack.c.0.s8 %v1715
        %v1717 = vlaneseq
        %v1718 = vshrl.u32 %v1717, 7
        %v1719 = vsub.s32 %v1716, %v1718
        %v1720 = vrot.slane %v1713, %v1719
        %v1722 = vadd.f32 %v1707, %v1720
        %s1723 = scalar_lea.vmem %s4, 192
        %v1724 = vld [vmem:[%s1723] sm:$0xff]
        %v1725 = vld [vmem:[%s1723 + $0x8] sm:$0xff]
        %v1726 = vld [vmem:[%s1723 + $0x10] sm:$0xff]
        %v1727 = vld [vmem:[%s1723 + $0x18] sm:$0xff]
        %1729 = vset.pattern.permute.xlu0 0
        %1730 = vperm.xlu0 %1729, %v1724
        %v1731 = vpop.permute.xlu0 %1730
        %1734 = vset.pattern.permute.xlu0 0
        %1735 = vperm.xlu0 %1734, %v1725
        %v1736 = vpop.permute.xlu0 %1735
        %1739 = vset.pattern.permute.xlu0 0
        %1740 = vperm.xlu0 %1739, %v1726
        %v1741 = vpop.permute.xlu0 %1740
        %1744 = vset.pattern.permute.xlu0 0
        %1745 = vperm.xlu0 %1744, %v1727
        %v1746 = vpop.permute.xlu0 %1745
        %v1749 = vcombine.high %v1722, %v1722
        %v1750 = vsel %vm390, %v1722, 0
        %v1752 = vsel %vm390, %v1749, 0
        %1754 = vmatprep.subr.mxu0 %v1752
        %1755 = vmatpush1.msra.mxu0 %v1750
        %1756 = vmatprep.subr.mxu0 0.0
        %1757 = vmatpush1.msra.mxu0 0.0
        %1758 = vmatprep.subr.mxu0 0.0
        %1759 = vmatpush1.msra.mxu0 0.0
        %1760 = vmatprep.subr.mxu0 0.0
        %1761 = vmatpush1.msra.mxu0 0.0
        %1762 = vmatprep.subr.mxu0 0.0
        %1763 = vmatpush1.msra.mxu0 0.0
        %1764 = vmatprep.subr.mxu0 0.0
        %1765 = vmatpush1.msra.mxu0 0.0
        %1766 = vmatprep.subr.mxu0 0.0
        %1767 = vmatpush1.msra.mxu0 0.0
        %1768 = vmatprep.subr.mxu0 0.0
        %1769 = vmatpush1.msra.mxu0 0.0
        %1770 = vmatprep.subr.mxu0 0.0
        %1771 = vmatpush1.msra.mxu0 0.0
        %1772 = vmatprep.subr.mxu0 0.0
        %1773 = vmatpush1.msra.mxu0 0.0
        %1774 = vmatprep.subr.mxu0 0.0
        %1775 = vmatpush1.msra.mxu0 0.0
        %1776 = vmatprep.subr.mxu0 0.0
        %1777 = vmatpush1.msra.mxu0 0.0
        %1778 = vmatprep.subr.mxu0 0.0
        %1779 = vmatpush1.msra.mxu0 0.0
        %1780 = vmatprep.subr.mxu0 0.0
        %1781 = vmatpush1.msra.mxu0 0.0
        %1782 = vmatprep.subr.mxu0 0.0
        %1783 = vmatpush1.msra.mxu0 0.0
        %1784 = vmatprep.subr.mxu0 0.0
        %1785 = vmatpush1.msra.mxu0 0.0
        %1786 = vmatprep.subr.mxu0 0.0
        %1787 = vmatpush1.msra.mxu0 0.0
        %1788 = vmatprep.subr.mxu0 0.0
        %1789 = vmatpush1.msra.mxu0 0.0
        %1790 = vmatprep.subr.mxu0 0.0
        %1791 = vmatpush1.msra.mxu0 0.0
        %1792 = vmatprep.subr.mxu0 0.0
        %1793 = vmatpush1.msra.mxu0 0.0
        %1794 = vmatprep.subr.mxu0 0.0
        %1795 = vmatpush1.msra.mxu0 0.0
        %1796 = vmatprep.subr.mxu0 0.0
        %1797 = vmatpush1.msra.mxu0 0.0
        %1798 = vmatprep.subr.mxu0 0.0
        %1799 = vmatpush1.msra.mxu0 0.0
        %1800 = vmatprep.subr.mxu0 0.0
        %1801 = vmatpush1.msra.mxu0 0.0
        %1802 = vmatprep.subr.mxu0 0.0
        %1803 = vmatpush1.msra.mxu0 0.0
        %1804 = vmatprep.subr.mxu0 0.0
        %1805 = vmatpush1.msra.mxu0 0.0
        %1806 = vmatprep.subr.mxu0 0.0
        %1807 = vmatpush1.msra.mxu0 0.0
        %1808 = vmatprep.subr.mxu0 0.0
        %1809 = vmatpush1.msra.mxu0 0.0
        %1810 = vmatprep.subr.mxu0 0.0
        %1811 = vmatpush1.msra.mxu0 0.0
        %1812 = vmatprep.subr.mxu0 0.0
        %1813 = vmatpush1.msra.mxu0 0.0
        %1814 = vmatprep.subr.mxu0 0.0
        %1815 = vmatpush1.msra.mxu0 0.0
        %1816 = vmatprep.subr.mxu0 0.0
        %1817 = vmatpush1.msra.mxu0 0.0
        %1818 = vmatprep.mubr.f32.mxu0 0.0
        %1819 = vmatmul.mubr.f32.gmra.mrb[0].mxu0 %v379
        %v1820 = vpop.f32.mrb[0].mxu0
        %v1821 = vadd.f32 %v1731, %v1820
        %v1822 = vpop.f32.mrb[0].mxu0
        %v1823 = vadd.f32 %v1731, %v1822
        %1824 = vmatprep.mubr.f32.mxu0 0.0
        %1825 = vmatmul.mubr.f32.gmra.mrb[0].mxu0 %v382
        %v1826 = vpop.f32.mrb[0].mxu0
        %v1827 = vadd.f32 %v1736, %v1826
        %v1828 = vpop.f32.mrb[0].mxu0
        %v1829 = vadd.f32 %v1736, %v1828
        %1830 = vmatprep.mubr.f32.mxu0 0.0
        %1831 = vmatmul.mubr.f32.gmra.mrb[0].mxu0 %v385
        %v1832 = vpop.f32.mrb[0].mxu0
        %v1833 = vadd.f32 %v1741, %v1832
        %v1834 = vpop.f32.mrb[0].mxu0
        %v1835 = vadd.f32 %v1741, %v1834
        %1836 = vmatprep.mubr.f32.mxu0 0.0
        %1837 = vmatmul.mubr.f32.gmra.mrb[0].mxu0 %v388
        %v1838 = vpop.f32.mrb[0].mxu0
        %v1839 = vadd.f32 %v1746, %v1838
        %v1840 = vpop.f32.mrb[0].mxu0
        %v1841 = vadd.f32 %v1746, %v1840
        %1842 = vdwg.mxu0
        %v1843 = vtanh.pop %v1821
        %v1844 = vtanh.pop %v1823
        %v1845 = vtanh.pop %v1827
        %v1846 = vtanh.pop %v1829
        %v1847 = vtanh.pop %v1833
        %v1848 = vtanh.pop %v1835
        %v1849 = vtanh.pop %v1839
        %v1850 = vtanh.pop %v1841
        %1851 = vmatprep.subr.mxu0 %v1844
        %1852 = vmatpush1.msra.mxu0 %v1843
        %1853 = vmatprep.subr.mxu0 %v1846
        %1854 = vmatpush1.msra.mxu0 %v1845
        %1855 = vmatprep.subr.mxu0 %v1848
        %1856 = vmatpush1.msra.mxu0 %v1847
        %1857 = vmatprep.subr.mxu0 %v1850
        %1858 = vmatpush1.msra.mxu0 %v1849
        %1859 = vmatprep.subr.mxu0 0.0
        %1860 = vmatpush1.msra.mxu0 0.0
        %1861 = vmatprep.subr.mxu0 0.0
        %1862 = vmatpush1.msra.mxu0 0.0
        %1863 = vmatprep.subr.mxu0 0.0
        %1864 = vmatpush1.msra.mxu0 0.0
        %1865 = vmatprep.subr.mxu0 0.0
        %1866 = vmatpush1.msra.mxu0 0.0
        %1867 = vmatprep.subr.mxu0 0.0
        %1868 = vmatpush1.msra.mxu0 0.0
        %1869 = vmatprep.subr.mxu0 0.0
        %1870 = vmatpush1.msra.mxu0 0.0
        %1871 = vmatprep.subr.mxu0 0.0
        %1872 = vmatpush1.msra.mxu0 0.0
        %1873 = vmatprep.subr.mxu0 0.0
        %1874 = vmatpush1.msra.mxu0 0.0
        %1875 = vmatprep.subr.mxu0 0.0
        %1876 = vmatpush1.msra.mxu0 0.0
        %1877 = vmatprep.subr.mxu0 0.0
        %1878 = vmatpush1.msra.mxu0 0.0
        %1879 = vmatprep.subr.mxu0 0.0
        %1880 = vmatpush1.msra.mxu0 0.0
        %1881 = vmatprep.subr.mxu0 0.0
        %1882 = vmatpush1.msra.mxu0 0.0
        %1883 = vmatprep.subr.mxu0 0.0
        %1884 = vmatpush1.msra.mxu0 0.0
        %1885 = vmatprep.subr.mxu0 0.0
        %1886 = vmatpush1.msra.mxu0 0.0
        %1887 = vmatprep.subr.mxu0 0.0
        %1888 = vmatpush1.msra.mxu0 0.0
        %1889 = vmatprep.subr.mxu0 0.0
        %1890 = vmatpush1.msra.mxu0 0.0
        %1891 = vmatprep.subr.mxu0 0.0
        %1892 = vmatpush1.msra.mxu0 0.0
        %1893 = vmatprep.subr.mxu0 0.0
        %1894 = vmatpush1.msra.mxu0 0.0
        %1895 = vmatprep.subr.mxu0 0.0
        %1896 = vmatpush1.msra.mxu0 0.0
        %1897 = vmatprep.subr.mxu0 0.0
        %1898 = vmatpush1.msra.mxu0 0.0
        %1899 = vmatprep.subr.mxu0 0.0
        %1900 = vmatpush1.msra.mxu0 0.0
        %1901 = vmatprep.subr.mxu0 0.0
        %1902 = vmatpush1.msra.mxu0 0.0
        %1903 = vmatprep.subr.mxu0 0.0
        %1904 = vmatpush1.msra.mxu0 0.0
        %1905 = vmatprep.subr.mxu0 0.0
        %1906 = vmatpush1.msra.mxu0 0.0
        %1907 = vmatprep.subr.mxu0 0.0
        %1908 = vmatpush1.msra.mxu0 0.0
        %1909 = vmatprep.subr.mxu0 0.0
        %1910 = vmatpush1.msra.mxu0 0.0
        %1911 = vmatprep.subr.mxu0 0.0
        %1912 = vmatpush1.msra.mxu0 0.0
        %1913 = vmatprep.subr.mxu0 0.0
        %1914 = vmatpush1.msra.mxu0 0.0
        %1915 = vmatprep.mubr.f32.mxu0 0.0
        %1916 = vmatmul.mubr.f32.gmra.mrb[0].mxu0 %v494
        %v1917 = vpop.f32.mrb[0].mxu0
        %v1918 = vadd.f32 0.0, %v1917
        %v1919 = vpop.f32.mrb[0].mxu0
        %v1920 = vadd.f32 0.0, %v1919
        %1921 = vdwg.mxu0
        %s1922 = sld [smem:[#allocation2 + $0x6]]
        %v1923 = vstv %s1922
        %v1924 = vmul.f32 %v1923, %v1722
        %s1925 = sld [smem:[#allocation4 + $0x6]]
        %v1926 = vstv %s1925
        %v1927 = vmul.f32 %v1926, %v1918
        %v1928 = vmul.f32 %v1926, %v1920
        %v1931 = vcombine.low %v1927, %v1928
        %v1933 = vadd.f32 %v1924, %v1931
        %s1934 = scalar_lea.vmem %s6, 24
        %v1935 = vld [vmem:[%s1934] sm:$0xf]
        %1937 = vset.pattern.permute.xlu0 0
        %1938 = vperm.xlu0 %1937, %v1935
        %v1939 = vpop.permute.xlu0 %1938
        %v1941 = vunpack.c.l.s4 839922192
        %v1942 = vunpack.c.0.s8 %v1941
        %v1943 = vlaneseq
        %v1944 = vshrl.u32 %v1943, 7
        %v1945 = vsub.s32 %v1942, %v1944
        %v1946 = vrot.slane %v1939, %v1945
        %v1948 = vadd.f32 %v1933, %v1946
        %s1949 = scalar_lea.vmem %s4, 224
        %v1950 = vld [vmem:[%s1949] sm:$0xff]
        %v1951 = vld [vmem:[%s1949 + $0x8] sm:$0xff]
        %v1952 = vld [vmem:[%s1949 + $0x10] sm:$0xff]
        %v1953 = vld [vmem:[%s1949 + $0x18] sm:$0xff]
        %1955 = vset.pattern.permute.xlu0 0
        %1956 = vperm.xlu0 %1955, %v1950
        %v1957 = vpop.permute.xlu0 %1956
        %1960 = vset.pattern.permute.xlu0 0
        %1961 = vperm.xlu0 %1960, %v1951
        %v1962 = vpop.permute.xlu0 %1961
        %1965 = vset.pattern.permute.xlu0 0
        %1966 = vperm.xlu0 %1965, %v1952
        %v1967 = vpop.permute.xlu0 %1966
        %1970 = vset.pattern.permute.xlu0 0
        %1971 = vperm.xlu0 %1970, %v1953
        %v1972 = vpop.permute.xlu0 %1971
        %v1975 = vcombine.high %v1948, %v1948
        %v1976 = vsel %vm390, %v1948, 0
        %v1978 = vsel %vm390, %v1975, 0
        %1980 = vmatprep.subr.mxu0 %v1978
        %1981 = vmatpush1.msra.mxu0 %v1976
        %1982 = vmatprep.subr.mxu0 0.0
        %1983 = vmatpush1.msra.mxu0 0.0
        %1984 = vmatprep.subr.mxu0 0.0
        %1985 = vmatpush1.msra.mxu0 0.0
        %1986 = vmatprep.subr.mxu0 0.0
        %1987 = vmatpush1.msra.mxu0 0.0
        %1988 = vmatprep.subr.mxu0 0.0
        %1989 = vmatpush1.msra.mxu0 0.0
        %1990 = vmatprep.subr.mxu0 0.0
        %1991 = vmatpush1.msra.mxu0 0.0
        %1992 = vmatprep.subr.mxu0 0.0
        %1993 = vmatpush1.msra.mxu0 0.0
        %1994 = vmatprep.subr.mxu0 0.0
        %1995 = vmatpush1.msra.mxu0 0.0
        %1996 = vmatprep.subr.mxu0 0.0
        %1997 = vmatpush1.msra.mxu0 0.0
        %1998 = vmatprep.subr.mxu0 0.0
        %1999 = vmatpush1.msra.mxu0 0.0
        %2000 = vmatprep.subr.mxu0 0.0
        %2001 = vmatpush1.msra.mxu0 0.0
        %2002 = vmatprep.subr.mxu0 0.0
        %2003 = vmatpush1.msra.mxu0 0.0
        %2004 = vmatprep.subr.mxu0 0.0
        %2005 = vmatpush1.msra.mxu0 0.0
        %2006 = vmatprep.subr.mxu0 0.0
        %2007 = vmatpush1.msra.mxu0 0.0
        %2008 = vmatprep.subr.mxu0 0.0
        %2009 = vmatpush1.msra.mxu0 0.0
        %2010 = vmatprep.subr.mxu0 0.0
        %2011 = vmatpush1.msra.mxu0 0.0
        %2012 = vmatprep.subr.mxu0 0.0
        %2013 = vmatpush1.msra.mxu0 0.0
        %2014 = vmatprep.subr.mxu0 0.0
        %2015 = vmatpush1.msra.mxu0 0.0
        %2016 = vmatprep.subr.mxu0 0.0
        %2017 = vmatpush1.msra.mxu0 0.0
        %2018 = vmatprep.subr.mxu0 0.0
        %2019 = vmatpush1.msra.mxu0 0.0
        %2020 = vmatprep.subr.mxu0 0.0
        %2021 = vmatpush1.msra.mxu0 0.0
        %2022 = vmatprep.subr.mxu0 0.0
        %2023 = vmatpush1.msra.mxu0 0.0
        %2024 = vmatprep.subr.mxu0 0.0
        %2025 = vmatpush1.msra.mxu0 0.0
        %2026 = vmatprep.subr.mxu0 0.0
        %2027 = vmatpush1.msra.mxu0 0.0
        %2028 = vmatprep.subr.mxu0 0.0
        %2029 = vmatpush1.msra.mxu0 0.0
        %2030 = vmatprep.subr.mxu0 0.0
        %2031 = vmatpush1.msra.mxu0 0.0
        %2032 = vmatprep.subr.mxu0 0.0
        %2033 = vmatpush1.msra.mxu0 0.0
        %2034 = vmatprep.subr.mxu0 0.0
        %2035 = vmatpush1.msra.mxu0 0.0
        %2036 = vmatprep.subr.mxu0 0.0
        %2037 = vmatpush1.msra.mxu0 0.0
        %2038 = vmatprep.subr.mxu0 0.0
        %2039 = vmatpush1.msra.mxu0 0.0
        %2040 = vmatprep.subr.mxu0 0.0
        %2041 = vmatpush1.msra.mxu0 0.0
        %2042 = vmatprep.subr.mxu0 0.0
        %2043 = vmatpush1.msra.mxu0 0.0
        %2044 = vmatprep.mubr.f32.mxu0 0.0
        %2045 = vmatmul.mubr.f32.gmra.mrb[0].mxu0 %v379
        %v2046 = vpop.f32.mrb[0].mxu0
        %v2047 = vadd.f32 %v1957, %v2046
        %v2048 = vpop.f32.mrb[0].mxu0
        %v2049 = vadd.f32 %v1957, %v2048
        %2050 = vmatprep.mubr.f32.mxu0 0.0
        %2051 = vmatmul.mubr.f32.gmra.mrb[0].mxu0 %v382
        %v2052 = vpop.f32.mrb[0].mxu0
        %v2053 = vadd.f32 %v1962, %v2052
        %v2054 = vpop.f32.mrb[0].mxu0
        %v2055 = vadd.f32 %v1962, %v2054
        %2056 = vmatprep.mubr.f32.mxu0 0.0
        %2057 = vmatmul.mubr.f32.gmra.mrb[0].mxu0 %v385
        %v2058 = vpop.f32.mrb[0].mxu0
        %v2059 = vadd.f32 %v1967, %v2058
        %v2060 = vpop.f32.mrb[0].mxu0
        %v2061 = vadd.f32 %v1967, %v2060
        %2062 = vmatprep.mubr.f32.mxu0 0.0
        %2063 = vmatmul.mubr.f32.gmra.mrb[0].mxu0 %v388
        %v2064 = vpop.f32.mrb[0].mxu0
        %v2065 = vadd.f32 %v1972, %v2064
        %v2066 = vpop.f32.mrb[0].mxu0
        %v2067 = vadd.f32 %v1972, %v2066
        %2068 = vdwg.mxu0
        %v2069 = vtanh.pop %v2047
        %v2070 = vtanh.pop %v2049
        %v2071 = vtanh.pop %v2053
        %v2072 = vtanh.pop %v2055
        %v2073 = vtanh.pop %v2059
        %v2074 = vtanh.pop %v2061
        %v2075 = vtanh.pop %v2065
        %v2076 = vtanh.pop %v2067
        %2077 = vmatprep.subr.mxu0 %v2070
        %2078 = vmatpush1.msra.mxu0 %v2069
        %2079 = vmatprep.subr.mxu0 %v2072
        %2080 = vmatpush1.msra.mxu0 %v2071
        %2081 = vmatprep.subr.mxu0 %v2074
        %2082 = vmatpush1.msra.mxu0 %v2073
        %2083 = vmatprep.subr.mxu0 %v2076
        %2084 = vmatpush1.msra.mxu0 %v2075
        %2085 = vmatprep.subr.mxu0 0.0
        %2086 = vmatpush1.msra.mxu0 0.0
        %2087 = vmatprep.subr.mxu0 0.0
        %2088 = vmatpush1.msra.mxu0 0.0
        %2089 = vmatprep.subr.mxu0 0.0
        %2090 = vmatpush1.msra.mxu0 0.0
        %2091 = vmatprep.subr.mxu0 0.0
        %2092 = vmatpush1.msra.mxu0 0.0
        %2093 = vmatprep.subr.mxu0 0.0
        %2094 = vmatpush1.msra.mxu0 0.0
        %2095 = vmatprep.subr.mxu0 0.0
        %2096 = vmatpush1.msra.mxu0 0.0
        %2097 = vmatprep.subr.mxu0 0.0
        %2098 = vmatpush1.msra.mxu0 0.0
        %2099 = vmatprep.subr.mxu0 0.0
        %2100 = vmatpush1.msra.mxu0 0.0
        %2101 = vmatprep.subr.mxu0 0.0
        %2102 = vmatpush1.msra.mxu0 0.0
        %2103 = vmatprep.subr.mxu0 0.0
        %2104 = vmatpush1.msra.mxu0 0.0
        %2105 = vmatprep.subr.mxu0 0.0
        %2106 = vmatpush1.msra.mxu0 0.0
        %2107 = vmatprep.subr.mxu0 0.0
        %2108 = vmatpush1.msra.mxu0 0.0
        %2109 = vmatprep.subr.mxu0 0.0
        %2110 = vmatpush1.msra.mxu0 0.0
        %2111 = vmatprep.subr.mxu0 0.0
        %2112 = vmatpush1.msra.mxu0 0.0
        %2113 = vmatprep.subr.mxu0 0.0
        %2114 = vmatpush1.msra.mxu0 0.0
        %2115 = vmatprep.subr.mxu0 0.0
        %2116 = vmatpush1.msra.mxu0 0.0
        %2117 = vmatprep.subr.mxu0 0.0
        %2118 = vmatpush1.msra.mxu0 0.0
        %2119 = vmatprep.subr.mxu0 0.0
        %2120 = vmatpush1.msra.mxu0 0.0
        %2121 = vmatprep.subr.mxu0 0.0
        %2122 = vmatpush1.msra.mxu0 0.0
        %2123 = vmatprep.subr.mxu0 0.0
        %2124 = vmatpush1.msra.mxu0 0.0
        %2125 = vmatprep.subr.mxu0 0.0
        %2126 = vmatpush1.msra.mxu0 0.0
        %2127 = vmatprep.subr.mxu0 0.0
        %2128 = vmatpush1.msra.mxu0 0.0
        %2129 = vmatprep.subr.mxu0 0.0
        %2130 = vmatpush1.msra.mxu0 0.0
        %2131 = vmatprep.subr.mxu0 0.0
        %2132 = vmatpush1.msra.mxu0 0.0
        %2133 = vmatprep.subr.mxu0 0.0
        %2134 = vmatpush1.msra.mxu0 0.0
        %2135 = vmatprep.subr.mxu0 0.0
        %2136 = vmatpush1.msra.mxu0 0.0
        %2137 = vmatprep.subr.mxu0 0.0
        %2138 = vmatpush1.msra.mxu0 0.0
        %2139 = vmatprep.subr.mxu0 0.0
        %2140 = vmatpush1.msra.mxu0 0.0
        %2141 = vmatprep.mubr.f32.mxu0 0.0
        %2142 = vmatmul.mubr.f32.gmra.mrb[0].mxu0 %v494
        %v2143 = vpop.f32.mrb[0].mxu0
        %v2144 = vadd.f32 0.0, %v2143
        %v2145 = vpop.f32.mrb[0].mxu0
        %v2146 = vadd.f32 0.0, %v2145
        %2147 = vdwg.mxu0
        %s2148 = sld [smem:[#allocation2 + $0x7]]
        %v2149 = vstv %s2148
        %v2150 = vmul.f32 %v2149, %v1948
        %s2151 = sld [smem:[#allocation4 + $0x7]]
        %v2152 = vstv %s2151
        %v2153 = vmul.f32 %v2152, %v2144
        %v2154 = vmul.f32 %v2152, %v2146
        %v2157 = vcombine.low %v2153, %v2154
        %v2159 = vadd.f32 %v2150, %v2157
        %s2160 = scalar_lea.vmem %s6, 28
        %v2161 = vld [vmem:[%s2160] sm:$0xf]
        %2163 = vset.pattern.permute.xlu0 0
        %2164 = vperm.xlu0 %2163, %v2161
        %v2165 = vpop.permute.xlu0 %2164
        %v2167 = vunpack.c.l.s4 839922192
        %v2168 = vunpack.c.0.s8 %v2167
        %v2169 = vlaneseq
        %v2170 = vshrl.u32 %v2169, 7
        %v2171 = vsub.s32 %v2168, %v2170
        %v2172 = vrot.slane %v2165, %v2171
        %v2174 = vadd.f32 %v2159, %v2172
        %s2175 = scalar_lea.vmem %s4, 256
        %v2176 = vld [vmem:[%s2175] sm:$0xff]
        %v2177 = vld [vmem:[%s2175 + $0x8] sm:$0xff]
        %v2178 = vld [vmem:[%s2175 + $0x10] sm:$0xff]
        %v2179 = vld [vmem:[%s2175 + $0x18] sm:$0xff]
        %2181 = vset.pattern.permute.xlu0 0
        %2182 = vperm.xlu0 %2181, %v2176
        %v2183 = vpop.permute.xlu0 %2182
        %2186 = vset.pattern.permute.xlu0 0
        %2187 = vperm.xlu0 %2186, %v2177
        %v2188 = vpop.permute.xlu0 %2187
        %2191 = vset.pattern.permute.xlu0 0
        %2192 = vperm.xlu0 %2191, %v2178
        %v2193 = vpop.permute.xlu0 %2192
        %2196 = vset.pattern.permute.xlu0 0
        %2197 = vperm.xlu0 %2196, %v2179
        %v2198 = vpop.permute.xlu0 %2197
        %v2201 = vcombine.high %v2174, %v2174
        %v2202 = vsel %vm390, %v2174, 0
        %v2204 = vsel %vm390, %v2201, 0
        %2206 = vmatprep.subr.mxu0 %v2204
        %2207 = vmatpush1.msra.mxu0 %v2202
        %2208 = vmatprep.subr.mxu0 0.0
        %2209 = vmatpush1.msra.mxu0 0.0
        %2210 = vmatprep.subr.mxu0 0.0
        %2211 = vmatpush1.msra.mxu0 0.0
        %2212 = vmatprep.subr.mxu0 0.0
        %2213 = vmatpush1.msra.mxu0 0.0
        %2214 = vmatprep.subr.mxu0 0.0
        %2215 = vmatpush1.msra.mxu0 0.0
        %2216 = vmatprep.subr.mxu0 0.0
        %2217 = vmatpush1.msra.mxu0 0.0
        %2218 = vmatprep.subr.mxu0 0.0
        %2219 = vmatpush1.msra.mxu0 0.0
        %2220 = vmatprep.subr.mxu0 0.0
        %2221 = vmatpush1.msra.mxu0 0.0
        %2222 = vmatprep.subr.mxu0 0.0
        %2223 = vmatpush1.msra.mxu0 0.0
        %2224 = vmatprep.subr.mxu0 0.0
        %2225 = vmatpush1.msra.mxu0 0.0
        %2226 = vmatprep.subr.mxu0 0.0
        %2227 = vmatpush1.msra.mxu0 0.0
        %2228 = vmatprep.subr.mxu0 0.0
        %2229 = vmatpush1.msra.mxu0 0.0
        %2230 = vmatprep.subr.mxu0 0.0
        %2231 = vmatpush1.msra.mxu0 0.0
        %2232 = vmatprep.subr.mxu0 0.0
        %2233 = vmatpush1.msra.mxu0 0.0
        %2234 = vmatprep.subr.mxu0 0.0
        %2235 = vmatpush1.msra.mxu0 0.0
        %2236 = vmatprep.subr.mxu0 0.0
        %2237 = vmatpush1.msra.mxu0 0.0
        %2238 = vmatprep.subr.mxu0 0.0
        %2239 = vmatpush1.msra.mxu0 0.0
        %2240 = vmatprep.subr.mxu0 0.0
        %2241 = vmatpush1.msra.mxu0 0.0
        %2242 = vmatprep.subr.mxu0 0.0
        %2243 = vmatpush1.msra.mxu0 0.0
        %2244 = vmatprep.subr.mxu0 0.0
        %2245 = vmatpush1.msra.mxu0 0.0
        %2246 = vmatprep.subr.mxu0 0.0
        %2247 = vmatpush1.msra.mxu0 0.0
        %2248 = vmatprep.subr.mxu0 0.0
        %2249 = vmatpush1.msra.mxu0 0.0
        %2250 = vmatprep.subr.mxu0 0.0
        %2251 = vmatpush1.msra.mxu0 0.0
        %2252 = vmatprep.subr.mxu0 0.0
        %2253 = vmatpush1.msra.mxu0 0.0
        %2254 = vmatprep.subr.mxu0 0.0
        %2255 = vmatpush1.msra.mxu0 0.0
        %2256 = vmatprep.subr.mxu0 0.0
        %2257 = vmatpush1.msra.mxu0 0.0
        %2258 = vmatprep.subr.mxu0 0.0
        %2259 = vmatpush1.msra.mxu0 0.0
        %2260 = vmatprep.subr.mxu0 0.0
        %2261 = vmatpush1.msra.mxu0 0.0
        %2262 = vmatprep.subr.mxu0 0.0
        %2263 = vmatpush1.msra.mxu0 0.0
        %2264 = vmatprep.subr.mxu0 0.0
        %2265 = vmatpush1.msra.mxu0 0.0
        %2266 = vmatprep.subr.mxu0 0.0
        %2267 = vmatpush1.msra.mxu0 0.0
        %2268 = vmatprep.subr.mxu0 0.0
        %2269 = vmatpush1.msra.mxu0 0.0
        %2270 = vmatprep.mubr.f32.mxu0 0.0
        %2271 = vmatmul.mubr.f32.gmra.mrb[0].mxu0 %v379
        %v2272 = vpop.f32.mrb[0].mxu0
        %v2273 = vadd.f32 %v2183, %v2272
        %v2274 = vpop.f32.mrb[0].mxu0
        %v2275 = vadd.f32 %v2183, %v2274
        %2276 = vmatprep.mubr.f32.mxu0 0.0
        %2277 = vmatmul.mubr.f32.gmra.mrb[0].mxu0 %v382
        %v2278 = vpop.f32.mrb[0].mxu0
        %v2279 = vadd.f32 %v2188, %v2278
        %v2280 = vpop.f32.mrb[0].mxu0
        %v2281 = vadd.f32 %v2188, %v2280
        %2282 = vmatprep.mubr.f32.mxu0 0.0
        %2283 = vmatmul.mubr.f32.gmra.mrb[0].mxu0 %v385
        %v2284 = vpop.f32.mrb[0].mxu0
        %v2285 = vadd.f32 %v2193, %v2284
        %v2286 = vpop.f32.mrb[0].mxu0
        %v2287 = vadd.f32 %v2193, %v2286
        %2288 = vmatprep.mubr.f32.mxu0 0.0
        %2289 = vmatmul.mubr.f32.gmra.mrb[0].mxu0 %v388
        %v2290 = vpop.f32.mrb[0].mxu0
        %v2291 = vadd.f32 %v2198, %v2290
        %v2292 = vpop.f32.mrb[0].mxu0
        %v2293 = vadd.f32 %v2198, %v2292
        %2294 = vdwg.mxu0
        %v2295 = vtanh.pop %v2273
        %v2296 = vtanh.pop %v2275
        %v2297 = vtanh.pop %v2279
        %v2298 = vtanh.pop %v2281
        %v2299 = vtanh.pop %v2285
        %v2300 = vtanh.pop %v2287
        %v2301 = vtanh.pop %v2291
        %v2302 = vtanh.pop %v2293
        %2303 = vmatprep.subr.mxu0 %v2296
        %2304 = vmatpush1.msra.mxu0 %v2295
        %2305 = vmatprep.subr.mxu0 %v2298
        %2306 = vmatpush1.msra.mxu0 %v2297
        %2307 = vmatprep.subr.mxu0 %v2300
        %2308 = vmatpush1.msra.mxu0 %v2299
        %2309 = vmatprep.subr.mxu0 %v2302
        %2310 = vmatpush1.msra.mxu0 %v2301
        %2311 = vmatprep.subr.mxu0 0.0
        %2312 = vmatpush1.msra.mxu0 0.0
        %2313 = vmatprep.subr.mxu0 0.0
        %2314 = vmatpush1.msra.mxu0 0.0
        %2315 = vmatprep.subr.mxu0 0.0
        %2316 = vmatpush1.msra.mxu0 0.0
        %2317 = vmatprep.subr.mxu0 0.0
        %2318 = vmatpush1.msra.mxu0 0.0
        %2319 = vmatprep.subr.mxu0 0.0
        %2320 = vmatpush1.msra.mxu0 0.0
        %2321 = vmatprep.subr.mxu0 0.0
        %2322 = vmatpush1.msra.mxu0 0.0
        %2323 = vmatprep.subr.mxu0 0.0
        %2324 = vmatpush1.msra.mxu0 0.0
        %2325 = vmatprep.subr.mxu0 0.0
        %2326 = vmatpush1.msra.mxu0 0.0
        %2327 = vmatprep.subr.mxu0 0.0
        %2328 = vmatpush1.msra.mxu0 0.0
        %2329 = vmatprep.subr.mxu0 0.0
        %2330 = vmatpush1.msra.mxu0 0.0
        %2331 = vmatprep.subr.mxu0 0.0
        %2332 = vmatpush1.msra.mxu0 0.0
        %2333 = vmatprep.subr.mxu0 0.0
        %2334 = vmatpush1.msra.mxu0 0.0
        %2335 = vmatprep.subr.mxu0 0.0
        %2336 = vmatpush1.msra.mxu0 0.0
        %2337 = vmatprep.subr.mxu0 0.0
        %2338 = vmatpush1.msra.mxu0 0.0
        %2339 = vmatprep.subr.mxu0 0.0
        %2340 = vmatpush1.msra.mxu0 0.0
        %2341 = vmatprep.subr.mxu0 0.0
        %2342 = vmatpush1.msra.mxu0 0.0
        %2343 = vmatprep.subr.mxu0 0.0
        %2344 = vmatpush1.msra.mxu0 0.0
        %2345 = vmatprep.subr.mxu0 0.0
        %2346 = vmatpush1.msra.mxu0 0.0
        %2347 = vmatprep.subr.mxu0 0.0
        %2348 = vmatpush1.msra.mxu0 0.0
        %2349 = vmatprep.subr.mxu0 0.0
        %2350 = vmatpush1.msra.mxu0 0.0
        %2351 = vmatprep.subr.mxu0 0.0
        %2352 = vmatpush1.msra.mxu0 0.0
        %2353 = vmatprep.subr.mxu0 0.0
        %2354 = vmatpush1.msra.mxu0 0.0
        %2355 = vmatprep.subr.mxu0 0.0
        %2356 = vmatpush1.msra.mxu0 0.0
        %2357 = vmatprep.subr.mxu0 0.0
        %2358 = vmatpush1.msra.mxu0 0.0
        %2359 = vmatprep.subr.mxu0 0.0
        %2360 = vmatpush1.msra.mxu0 0.0
        %2361 = vmatprep.subr.mxu0 0.0
        %2362 = vmatpush1.msra.mxu0 0.0
        %2363 = vmatprep.subr.mxu0 0.0
        %2364 = vmatpush1.msra.mxu0 0.0
        %2365 = vmatprep.subr.mxu0 0.0
        %2366 = vmatpush1.msra.mxu0 0.0
        %2367 = vmatprep.mubr.f32.mxu0 0.0
        %2368 = vmatmul.mubr.f32.gmra.mrb[0].mxu0 %v494
        %v2369 = vpop.f32.mrb[0].mxu0
        %v2370 = vadd.f32 0.0, %v2369
        %v2371 = vpop.f32.mrb[0].mxu0
        %v2372 = vadd.f32 0.0, %v2371
        %2373 = vdwg.mxu0
        %s2374 = sld [smem:[#allocation2 + $0x8]]
        %v2375 = vstv %s2374
        %v2376 = vmul.f32 %v2375, %v2174
        %s2377 = sld [smem:[#allocation4 + $0x8]]
        %v2378 = vstv %s2377
        %v2379 = vmul.f32 %v2378, %v2370
        %v2380 = vmul.f32 %v2378, %v2372
        %v2383 = vcombine.low %v2379, %v2380
        %v2385 = vadd.f32 %v2376, %v2383
        %s2386 = scalar_lea.vmem %s6, 32
        %v2387 = vld [vmem:[%s2386] sm:$0xf]
        %2389 = vset.pattern.permute.xlu0 0
        %2390 = vperm.xlu0 %2389, %v2387
        %v2391 = vpop.permute.xlu0 %2390
        %v2393 = vunpack.c.l.s4 839922192
        %v2394 = vunpack.c.0.s8 %v2393
        %v2395 = vlaneseq
        %v2396 = vshrl.u32 %v2395, 7
        %v2397 = vsub.s32 %v2394, %v2396
        %v2398 = vrot.slane %v2391, %v2397
        %v2400 = vadd.f32 %v2385, %v2398
        %s2401 = scalar_lea.vmem %s4, 288
        %v2402 = vld [vmem:[%s2401] sm:$0xff]
        %v2403 = vld [vmem:[%s2401 + $0x8] sm:$0xff]
        %v2404 = vld [vmem:[%s2401 + $0x10] sm:$0xff]
        %v2405 = vld [vmem:[%s2401 + $0x18] sm:$0xff]
        %2407 = vset.pattern.permute.xlu0 0
        %2408 = vperm.xlu0 %2407, %v2402
        %v2409 = vpop.permute.xlu0 %2408
        %2412 = vset.pattern.permute.xlu0 0
        %2413 = vperm.xlu0 %2412, %v2403
        %v2414 = vpop.permute.xlu0 %2413
        %2417 = vset.pattern.permute.xlu0 0
        %2418 = vperm.xlu0 %2417, %v2404
        %v2419 = vpop.permute.xlu0 %2418
        %2422 = vset.pattern.permute.xlu0 0
        %2423 = vperm.xlu0 %2422, %v2405
        %v2424 = vpop.permute.xlu0 %2423
        %v2427 = vcombine.high %v2400, %v2400
        %v2428 = vsel %vm390, %v2400, 0
        %v2430 = vsel %vm390, %v2427, 0
        %2432 = vmatprep.subr.mxu0 %v2430
        %2433 = vmatpush1.msra.mxu0 %v2428
        %2434 = vmatprep.subr.mxu0 0.0
        %2435 = vmatpush1.msra.mxu0 0.0
        %2436 = vmatprep.subr.mxu0 0.0
        %2437 = vmatpush1.msra.mxu0 0.0
        %2438 = vmatprep.subr.mxu0 0.0
        %2439 = vmatpush1.msra.mxu0 0.0
        %2440 = vmatprep.subr.mxu0 0.0
        %2441 = vmatpush1.msra.mxu0 0.0
        %2442 = vmatprep.subr.mxu0 0.0
        %2443 = vmatpush1.msra.mxu0 0.0
        %2444 = vmatprep.subr.mxu0 0.0
        %2445 = vmatpush1.msra.mxu0 0.0
        %2446 = vmatprep.subr.mxu0 0.0
        %2447 = vmatpush1.msra.mxu0 0.0
        %2448 = vmatprep.subr.mxu0 0.0
        %2449 = vmatpush1.msra.mxu0 0.0
        %2450 = vmatprep.subr.mxu0 0.0
        %2451 = vmatpush1.msra.mxu0 0.0
        %2452 = vmatprep.subr.mxu0 0.0
        %2453 = vmatpush1.msra.mxu0 0.0
        %2454 = vmatprep.subr.mxu0 0.0
        %2455 = vmatpush1.msra.mxu0 0.0
        %2456 = vmatprep.subr.mxu0 0.0
        %2457 = vmatpush1.msra.mxu0 0.0
        %2458 = vmatprep.subr.mxu0 0.0
        %2459 = vmatpush1.msra.mxu0 0.0
        %2460 = vmatprep.subr.mxu0 0.0
        %2461 = vmatpush1.msra.mxu0 0.0
        %2462 = vmatprep.subr.mxu0 0.0
        %2463 = vmatpush1.msra.mxu0 0.0
        %2464 = vmatprep.subr.mxu0 0.0
        %2465 = vmatpush1.msra.mxu0 0.0
        %2466 = vmatprep.subr.mxu0 0.0
        %2467 = vmatpush1.msra.mxu0 0.0
        %2468 = vmatprep.subr.mxu0 0.0
        %2469 = vmatpush1.msra.mxu0 0.0
        %2470 = vmatprep.subr.mxu0 0.0
        %2471 = vmatpush1.msra.mxu0 0.0
        %2472 = vmatprep.subr.mxu0 0.0
        %2473 = vmatpush1.msra.mxu0 0.0
        %2474 = vmatprep.subr.mxu0 0.0
        %2475 = vmatpush1.msra.mxu0 0.0
        %2476 = vmatprep.subr.mxu0 0.0
        %2477 = vmatpush1.msra.mxu0 0.0
        %2478 = vmatprep.subr.mxu0 0.0
        %2479 = vmatpush1.msra.mxu0 0.0
        %2480 = vmatprep.subr.mxu0 0.0
        %2481 = vmatpush1.msra.mxu0 0.0
        %2482 = vmatprep.subr.mxu0 0.0
        %2483 = vmatpush1.msra.mxu0 0.0
        %2484 = vmatprep.subr.mxu0 0.0
        %2485 = vmatpush1.msra.mxu0 0.0
        %2486 = vmatprep.subr.mxu0 0.0
        %2487 = vmatpush1.msra.mxu0 0.0
        %2488 = vmatprep.subr.mxu0 0.0
        %2489 = vmatpush1.msra.mxu0 0.0
        %2490 = vmatprep.subr.mxu0 0.0
        %2491 = vmatpush1.msra.mxu0 0.0
        %2492 = vmatprep.subr.mxu0 0.0
        %2493 = vmatpush1.msra.mxu0 0.0
        %2494 = vmatprep.subr.mxu0 0.0
        %2495 = vmatpush1.msra.mxu0 0.0
        %2496 = vmatprep.mubr.f32.mxu0 0.0
        %2497 = vmatmul.mubr.f32.gmra.mrb[0].mxu0 %v379
        %v2498 = vpop.f32.mrb[0].mxu0
        %v2499 = vadd.f32 %v2409, %v2498
        %v2500 = vpop.f32.mrb[0].mxu0
        %v2501 = vadd.f32 %v2409, %v2500
        %2502 = vmatprep.mubr.f32.mxu0 0.0
        %2503 = vmatmul.mubr.f32.gmra.mrb[0].mxu0 %v382
        %v2504 = vpop.f32.mrb[0].mxu0
        %v2505 = vadd.f32 %v2414, %v2504
        %v2506 = vpop.f32.mrb[0].mxu0
        %v2507 = vadd.f32 %v2414, %v2506
        %2508 = vmatprep.mubr.f32.mxu0 0.0
        %2509 = vmatmul.mubr.f32.gmra.mrb[0].mxu0 %v385
        %v2510 = vpop.f32.mrb[0].mxu0
        %v2511 = vadd.f32 %v2419, %v2510
        %v2512 = vpop.f32.mrb[0].mxu0
        %v2513 = vadd.f32 %v2419, %v2512
        %2514 = vmatprep.mubr.f32.mxu0 0.0
        %2515 = vmatmul.mubr.f32.gmra.mrb[0].mxu0 %v388
        %v2516 = vpop.f32.mrb[0].mxu0
        %v2517 = vadd.f32 %v2424, %v2516
        %v2518 = vpop.f32.mrb[0].mxu0
        %v2519 = vadd.f32 %v2424, %v2518
        %2520 = vdwg.mxu0
        %v2521 = vtanh.pop %v2499
        %v2522 = vtanh.pop %v2501
        %v2523 = vtanh.pop %v2505
        %v2524 = vtanh.pop %v2507
        %v2525 = vtanh.pop %v2511
        %v2526 = vtanh.pop %v2513
        %v2527 = vtanh.pop %v2517
        %v2528 = vtanh.pop %v2519
        %2529 = vmatprep.subr.mxu0 %v2522
        %2530 = vmatpush1.msra.mxu0 %v2521
        %2531 = vmatprep.subr.mxu0 %v2524
        %2532 = vmatpush1.msra.mxu0 %v2523
        %2533 = vmatprep.subr.mxu0 %v2526
        %2534 = vmatpush1.msra.mxu0 %v2525
        %2535 = vmatprep.subr.mxu0 %v2528
        %2536 = vmatpush1.msra.mxu0 %v2527
        %2537 = vmatprep.subr.mxu0 0.0
        %2538 = vmatpush1.msra.mxu0 0.0
        %2539 = vmatprep.subr.mxu0 0.0
        %2540 = vmatpush1.msra.mxu0 0.0
        %2541 = vmatprep.subr.mxu0 0.0
        %2542 = vmatpush1.msra.mxu0 0.0
        %2543 = vmatprep.subr.mxu0 0.0
        %2544 = vmatpush1.msra.mxu0 0.0
        %2545 = vmatprep.subr.mxu0 0.0
        %2546 = vmatpush1.msra.mxu0 0.0
        %2547 = vmatprep.subr.mxu0 0.0
        %2548 = vmatpush1.msra.mxu0 0.0
        %2549 = vmatprep.subr.mxu0 0.0
        %2550 = vmatpush1.msra.mxu0 0.0
        %2551 = vmatprep.subr.mxu0 0.0
        %2552 = vmatpush1.msra.mxu0 0.0
        %2553 = vmatprep.subr.mxu0 0.0
        %2554 = vmatpush1.msra.mxu0 0.0
        %2555 = vmatprep.subr.mxu0 0.0
        %2556 = vmatpush1.msra.mxu0 0.0
        %2557 = vmatprep.subr.mxu0 0.0
        %2558 = vmatpush1.msra.mxu0 0.0
        %2559 = vmatprep.subr.mxu0 0.0
        %2560 = vmatpush1.msra.mxu0 0.0
        %2561 = vmatprep.subr.mxu0 0.0
        %2562 = vmatpush1.msra.mxu0 0.0
        %2563 = vmatprep.subr.mxu0 0.0
        %2564 = vmatpush1.msra.mxu0 0.0
        %2565 = vmatprep.subr.mxu0 0.0
        %2566 = vmatpush1.msra.mxu0 0.0
        %2567 = vmatprep.subr.mxu0 0.0
        %2568 = vmatpush1.msra.mxu0 0.0
        %2569 = vmatprep.subr.mxu0 0.0
        %2570 = vmatpush1.msra.mxu0 0.0
        %2571 = vmatprep.subr.mxu0 0.0
        %2572 = vmatpush1.msra.mxu0 0.0
        %2573 = vmatprep.subr.mxu0 0.0
        %2574 = vmatpush1.msra.mxu0 0.0
        %2575 = vmatprep.subr.mxu0 0.0
        %2576 = vmatpush1.msra.mxu0 0.0
        %2577 = vmatprep.subr.mxu0 0.0
        %2578 = vmatpush1.msra.mxu0 0.0
        %2579 = vmatprep.subr.mxu0 0.0
        %2580 = vmatpush1.msra.mxu0 0.0
        %2581 = vmatprep.subr.mxu0 0.0
        %2582 = vmatpush1.msra.mxu0 0.0
        %2583 = vmatprep.subr.mxu0 0.0
        %2584 = vmatpush1.msra.mxu0 0.0
        %2585 = vmatprep.subr.mxu0 0.0
        %2586 = vmatpush1.msra.mxu0 0.0
        %2587 = vmatprep.subr.mxu0 0.0
        %2588 = vmatpush1.msra.mxu0 0.0
        %2589 = vmatprep.subr.mxu0 0.0
        %2590 = vmatpush1.msra.mxu0 0.0
        %2591 = vmatprep.subr.mxu0 0.0
        %2592 = vmatpush1.msra.mxu0 0.0
        %2593 = vmatprep.mubr.f32.mxu0 0.0
        %2594 = vmatmul.mubr.f32.gmra.mrb[0].mxu0 %v494
        %v2595 = vpop.f32.mrb[0].mxu0
        %v2596 = vadd.f32 0.0, %v2595
        %v2597 = vpop.f32.mrb[0].mxu0
        %v2598 = vadd.f32 0.0, %v2597
        %2599 = vdwg.mxu0
        %s2600 = sld [smem:[#allocation2 + $0x9]]
        %v2601 = vstv %s2600
        %v2602 = vmul.f32 %v2601, %v2400
        %s2603 = sld [smem:[#allocation4 + $0x9]]
        %v2604 = vstv %s2603
        %v2605 = vmul.f32 %v2604, %v2596
        %v2606 = vmul.f32 %v2604, %v2598
        %v2609 = vcombine.low %v2605, %v2606
        %v2611 = vadd.f32 %v2602, %v2609
        %s2612 = scalar_lea.vmem %s6, 36
        %v2613 = vld [vmem:[%s2612] sm:$0xf]
        %2615 = vset.pattern.permute.xlu0 0
        %2616 = vperm.xlu0 %2615, %v2613
        %v2617 = vpop.permute.xlu0 %2616
        %v2619 = vunpack.c.l.s4 839922192
        %v2620 = vunpack.c.0.s8 %v2619
        %v2621 = vlaneseq
        %v2622 = vshrl.u32 %v2621, 7
        %v2623 = vsub.s32 %v2620, %v2622
        %v2624 = vrot.slane %v2617, %v2623
        %v2626 = vadd.f32 %v2611, %v2624
        %v2627 = vmax.f32 %v2626, -1.0
        %v2628 = vmin.f32 %v2627, 1.0
        %2629 = vst [vmem:[%s343] sm:$0xff] %v2628
        %s2630 = smul.u32 2, %s25
        %p2631 = scmp.lt.s32.totalorder %s24, 1
        %s2632 = scalar_select %p2631, %s24, 1
        %p2633 = scmp.lt.s32.totalorder %s2630, 1
        %s2634 = scalar_select %p2633, %s2630, 1
        %s2635 = smul.addr %s2632, 2
        %s2636 = sadd.s32 %s2634, %s2635
        %s2637 = smul.addr %s2636, 4
        %s2638 = scalar_lea.vmem %s7, %s2637
        // Predicated region
        $region57: #{run.1} parent=47 // pred_check
          %p2639 = pneg %p206
        $region58: #{run.1} parent=47 // pred_check_branch
          %2641 = sbr.rel (%p2639) target = $region60
        $region59: #{run.1} parent=47 // pred_region
          %s2642 = smul.u32 2, %s25
        $region60: #{run.1} parent=47 // pred_fallthru
          _
      $region48: #{run.1} parent=5 // pred_fallthru
        _
      %p2643 = scmp.le.s32.totalorder 2, %s15
      // Predicated region
      $region61: #{run.1} parent=5 // pred_check
        %p2644 = pneg %p2643
      $region62: #{run.1} parent=5 // pred_check_branch
        %2646 = sbr.rel (%p2644) target = $region64
      $region63: #{run.1} parent=5 // pred_region
        %s2647 = ssub.s32 %s15, 2
        // Predicated region
        $region65: #{run.1} parent=63 // pred_check
          %p2648 = pneg %p212
        $region66: #{run.1} parent=63 // pred_check_branch
          %2650 = sbr.rel (%p2648) target = $region68
        $region67: #{run.1} parent=63 // pred_region
          %s2651 = smul.u32 2, %s27
          %p2652 = scmp.lt.s32.totalorder %s26, 1
          %s2653 = scalar_select %p2652, %s26, 1
          %p2654 = scmp.lt.s32.totalorder %s2651, 1
          %s2655 = scalar_select %p2654, %s2651, 1
          %s2656 = smul.addr %s2653, 2
          %s2657 = sadd.s32 %s2655, %s2656
          %s2658 = smul.addr %s2657, 4
          %s2659 = scalar_lea.vmem %s7, %s2658
        $region68: #{run.1} parent=63 // pred_fallthru
          _
      $region64: #{run.1} parent=5 // pred_fallthru
        _
    $region6: #{run.1} parent=1 // loop_footer
      %s19 = sadd.s32 1, %s15
    $region7: #{run.1} parent=1 // loop_footer_branch
      %14 = sbr.rel target = $region3
    $region8: #{run.1} parent=1 // loop_exit
      _
    %2660 = vsyncpa [#allocation3], 1
    %s2661 = scalar_lea.sflag [#allocation3], 1
    %2662 = vsyncpa %s2661, 1
    %2663 = vsyncpa [#allocation5], 1

</llo_original>
